<compile_context>
chip_gen: v7x
topology: tpu7x:2x2x1
jax: 0.10.0
libtpu: 0.0.40
codegen_flags: <defaults>
</compile_context>

<pallas_src>
import functools

import jax
import jax.numpy as jnp
from jax.experimental import pallas as pl
from jax.experimental.pallas import tpu as pltpu

NEG = -1e30  # "minus infinity" pad value for max pooling (never selected post-SiLU)


# ------------------------------------------------------------------ kernel

def spp_kernel(x_ref, w1_ref, s1_ref, b1_ref, w2_ref, s2_ref, b2_ref,
               o_ref, cat_ref, *, H, W):
    """Fused SPP forward for one batch image in (C, H*W) lane-dense layout."""
    c_p = cat_ref.shape[0] // 4
    HWp = cat_ref.shape[1]

    # ---- cv1: 1x1 conv as (c_, C1) @ (C1, HW) in bf16, f32 acc, BN + SiLU ---
    x1 = jnp.dot(w1_ref[...], x_ref[0], preferred_element_type=jnp.float32)
    x1 = x1 * s1_ref[...] + b1_ref[...]
    x1 = x1 * jax.nn.sigmoid(x1)                               # SiLU (f32)

    # ---- shift-validity masks: built ONCE, reused by all three pools --------
    flat = jax.lax.broadcasted_iota(jnp.int32, (1, HWp), 1)
    if (W & (W - 1)) == 0:                                     # power-of-two W
        col = flat & (W - 1)
        row = flat >> (W.bit_length() - 1)
    else:
        col = flat % W
        row = flat // W
    SHIFTS = (-2, -1, 1, 2)
    h_ok = {d: (col >= -d) if d < 0 else (col < W - d) for d in SHIFTS}
    v_ok = {d: (row >= -d) if d < 0 else (row < H - d) for d in SHIFTS}

    # ---- 5x5 stride-1 max pool: separable (1x5 then 5x1), pure roll+mask ----
    # pltpu.roll keeps the shifts on the XLU; masks neutralise row/array wrap
    # and off-image rows (equivalent to -inf padding).
    def pool5(feat):
        h = feat
        for d in SHIFTS:                                       # 1x5 along W
            v = pltpu.roll(feat, shift=(-d) % HWp, axis=1)
            h = jnp.maximum(h, jnp.where(h_ok[d], v, NEG))
        m = h
        for d in SHIFTS:                                       # 5x1 along H
            v = pltpu.roll(h, shift=(-d * W) % HWp, axis=1)
            m = jnp.maximum(m, jnp.where(v_ok[d], v, NEG))
        return m

    # ---- stream [x1 | m5 | m9 | m13] into the concat scratch (bf16 operand) --
    cat_ref[0 * c_p:1 * c_p, :] = x1.astype(cat_ref.dtype)
    m5 = pool5(x1)                                             # k = 5
    cat_ref[1 * c_p:2 * c_p, :] = m5.astype(cat_ref.dtype)
    m9 = pool5(m5)                                             # k = 9  (5 o 5)
    cat_ref[2 * c_p:3 * c_p, :] = m9.astype(cat_ref.dtype)
    m13 = pool5(m9)                                            # k = 13 (5 o 5 o 5)
    cat_ref[3 * c_p:4 * c_p, :] = m13.astype(cat_ref.dtype)

    # ---- cv2: single (c2, 4c_) @ (4c_, HW) matmul replaces the concat --------
    y = jnp.dot(w2_ref[...], cat_ref[...], preferred_element_type=jnp.float32)
    y = y * s2_ref[...] + b2_ref[...]
    y = y * jax.nn.sigmoid(y)                                  # SiLU (f32)
    o_ref[0] = y                                               # lane-dense store


# ----------------------------------------------------------------- wrapper

def _round_up(v, m):
    return ((v + m - 1) // m) * m


def spp_forward(x_nchw, p):
    """SPP forward. x: (B, C1, H, W) NCHW float32 -> (B, C2, H, W) float32."""
    B, C1, H, W = x_nchw.shape
    HW = H * W
    c_ = p['w1'].shape[0]
    c2 = p['w2'].shape[0]

    # channel pad to bf16 sublane tile (16), spatial pad to lane width (128)
    C1p, c_p, c2p = _round_up(C1, 16), _round_up(c_, 16), _round_up(c2, 16)
    HWp = _round_up(HW, 128)

    # activations: free reshape, zero pad, bf16 cast (halves HBM/VMEM traffic)
    x2d = x_nchw.reshape(B, C1, HW)
    x2d = jnp.pad(x2d, ((0, 0), (0, C1p - C1), (0, HWp - HW)))
    x2d = x2d.astype(jnp.bfloat16)

    # weights / folded BN: zero-padded rows & cols keep padded channels inert
    w1 = jnp.zeros((c_p, C1p), jnp.float32).at[:c_, :C1].set(p['w1'])
    w1 = w1.astype(jnp.bfloat16)
    s1 = jnp.zeros((c_p, 1), jnp.float32).at[:c_].set(p['s1'])
    b1 = jnp.zeros((c_p, 1), jnp.float32).at[:c_].set(p['b1'])
    w2 = jnp.zeros((c2p, 4 * c_p), jnp.float32)
    for t in range(4):          # scatter the 4 Cin blocks [x1|m5|m9|m13]
        w2 = w2.at[:c2, t * c_p:t * c_p + c_].set(p['w2'][:, t * c_:(t + 1) * c_])
    w2 = w2.astype(jnp.bfloat16)
    s2 = jnp.zeros((c2p, 1), jnp.float32).at[:c2].set(p['s2'])
    b2 = jnp.zeros((c2p, 1), jnp.float32).at[:c2].set(p['b2'])

    # per-step working set: double-buffered I/O + cat scratch + weights + live maps
    est = (2 * C1p * HWp * 2 + 2 * c2p * HWp * 4 + 4 * c_p * HWp * 2
           + (c_p * C1p + c2p * 4 * c_p) * 2 + 8 * c_p * HWp * 4)
    vmem_limit = int(min(100 * 2**20, max(32 * 2**20, 2 * est)))

    out = pl.pallas_call(
        functools.partial(spp_kernel, H=H, W=W),
        out_shape=jax.ShapeDtypeStruct((B, c2p, HWp), jnp.float32),
        grid=(B,),
        in_specs=[
            pl.BlockSpec((1, C1p, HWp), lambda b: (b, 0, 0)),   # x (one image)
            pl.BlockSpec((c_p, C1p), lambda b: (0, 0)),         # cv1 weight (bf16)
            pl.BlockSpec((c_p, 1), lambda b: (0, 0)),           # cv1 BN scale
            pl.BlockSpec((c_p, 1), lambda b: (0, 0)),           # cv1 BN bias
            pl.BlockSpec((c2p, 4 * c_p), lambda b: (0, 0)),     # cv2 weight (bf16)
            pl.BlockSpec((c2p, 1), lambda b: (0, 0)),           # cv2 BN scale
            pl.BlockSpec((c2p, 1), lambda b: (0, 0)),           # cv2 BN bias
        ],
        out_specs=pl.BlockSpec((1, c2p, HWp), lambda b: (b, 0, 0)),
        scratch_shapes=[pltpu.VMEM((4 * c_p, HWp), jnp.bfloat16)],  # concat slab
        compiler_params=pltpu.CompilerParams(
            dimension_semantics=("parallel",),
            vmem_limit_bytes=vmem_limit),
    )(x2d, w1, s1, b1, w2, s2, b2)

    return out[:, :c2, :HW].reshape(B, c2, H, W)    # crop pad, back to NCHW


# --------------------------------------------------- pure-JAX references

def _maxpool_ref(x, k):
    padv = k // 2
    return jax.lax.reduce_window(
        x, -jnp.inf, jax.lax.max,
        window_dimensions=(1, 1, k, k),
        window_strides=(1, 1, 1, 1),
        padding=((0, 0), (0, 0), (padv, padv), (padv, padv)))


def _conv_bn_silu_ref(x, w, s, b, mxu_dtype=None):
    if mxu_dtype is not None:       # mimic the kernel's bf16 MXU operands
        x = x.astype(mxu_dtype).astype(jnp.float32)
        w = w.astype(mxu_dtype).astype(jnp.float32)
    y = jnp.einsum('bchw,oc->bohw', x, w, precision=jax.lax.Precision.HIGHEST)
    y = y * s[:, 0][None, :, None, None] + b[:, 0][None, :, None, None]
    return y * jax.nn.sigmoid(y)


def spp_forward_ref(x, p, mxu_dtype=None):
    x1 = _conv_bn_silu_ref(x, p['w1'], p['s1'], p['b1'], mxu_dtype)
    cat = jnp.concatenate(
        [x1, _maxpool_ref(x1, 5), _maxpool_ref(x1, 9), _maxpool_ref(x1, 13)],
        axis=1)
    return _conv_bn_silu_ref(cat, p['w2'], p['s2'], p['b2'], mxu_dtype)


# -------------------------------------------------------------- params

def init_params(key, c1, c2):
    c_ = c1 // 2
    keys = iter(jax.random.split(key, 16))

    def bn(c, eps=1e-5):   # eval-mode BatchNorm2d folded to (scale, bias)
        gamma = 1.0 + 0.1 * jax.random.normal(next(keys), (c,), jnp.float32)
        beta = 0.1 * jax.random.normal(next(keys), (c,), jnp.float32)
        mean = 0.1 * jax.random.normal(next(keys), (c,), jnp.float32)
        var = 1.0 + 0.5 * jax.random.uniform(next(keys), (c,), jnp.float32)
        scale = gamma / jnp.sqrt(var + eps)
        bias = beta - mean * scale
        return scale.reshape(c, 1), bias.reshape(c, 1)

    p = {}
    # conv weights stored as (Cout, Cin) = PyTorch 1x1 conv weight squeezed
    p['w1'] = 0.3 * jax.random.normal(next(keys), (c_, c1), jnp.float32)
    p['s1'], p['b1'] = bn(c_)
    p['w2'] = 0.3 * jax.random.normal(next(keys), (c2, 4 * c_), jnp.float32)
    p['s2'], p['b2'] = bn(c2)
    return p


# --------------------------------------------------------------------- main

if __name__ == "__main__":
    B, C1, C2, H, W = 2, 4, 8, 16, 16          # c_ = 2
    key = jax.random.PRNGKey(0)
    k_x, k_p = jax.random.split(key)
    x = jax.random.normal(k_x, (B, C1, H, W), jnp.float32)   # NCHW like PyTorch
    params = init_params(k_p, C1, C2)

    fwd = jax.jit(spp_forward)
    out = jax.block_until_ready(fwd(x, params))

    ref_match = spp_forward_ref(x, params, mxu_dtype=jnp.bfloat16)  # precision-matched
    ref_f32 = spp_forward_ref(x, params)                            # full f32 module

    assert out.shape == (B, C2, H, W), out.shape
    assert jnp.allclose(out, ref_match, rtol=2e-3, atol=2e-3), float(
        jnp.max(jnp.abs(out - ref_match)))
    assert jnp.allclose(out, ref_f32, rtol=1e-1, atol=1e-1), float(
        jnp.max(jnp.abs(out - ref_f32)))
    print("KERNEL_OK")
</pallas_src>

<mosaic_0001>
module attributes {stable_mosaic.version = 11 : i64} {
  func.func @spp_kernel(%arg0: i32, %arg1: memref<1x16x256xbf16, #tpu.memory_space<vmem>>, %arg2: memref<16x16xbf16, #tpu.memory_space<vmem>>, %arg3: memref<16x1xf32, #tpu.memory_space<vmem>>, %arg4: memref<16x1xf32, #tpu.memory_space<vmem>>, %arg5: memref<16x64xbf16, #tpu.memory_space<vmem>>, %arg6: memref<16x1xf32, #tpu.memory_space<vmem>>, %arg7: memref<16x1xf32, #tpu.memory_space<vmem>>, %arg8: memref<1x16x256xf32, #tpu.memory_space<vmem>>, %arg9: memref<64x256xbf16, #tpu.memory_space<vmem>>) attributes {dimension_semantics = [#tpu.dimension_semantics<parallel>], iteration_bounds = array<i64: 2>, scalar_prefetch = 0 : i64, scratch_operands = 1 : i64, tpu.core_type = #tpu.core_type<tc>, window_params = [{transform_indices = @transform_0, window_bounds = array<i64: 1, 16, 256>}, {pipeline_mode = #tpu.pipeline_mode<synchronous>, transform_indices = @transform_1, window_bounds = array<i64: 16, 16>}, {pipeline_mode = #tpu.pipeline_mode<synchronous>, transform_indices = @transform_2, window_bounds = array<i64: 16, 1>}, {pipeline_mode = #tpu.pipeline_mode<synchronous>, transform_indices = @transform_3, window_bounds = array<i64: 16, 1>}, {pipeline_mode = #tpu.pipeline_mode<synchronous>, transform_indices = @transform_4, window_bounds = array<i64: 16, 64>}, {pipeline_mode = #tpu.pipeline_mode<synchronous>, transform_indices = @transform_5, window_bounds = array<i64: 16, 1>}, {pipeline_mode = #tpu.pipeline_mode<synchronous>, transform_indices = @transform_6, window_bounds = array<i64: 16, 1>}, {transform_indices = @transform_7, window_bounds = array<i64: 1, 16, 256>}]} {
    %c0 = arith.constant 0 : index
    %c0_0 = arith.constant 0 : index
    %0 = vector.load %arg2[%c0, %c0_0] : memref<16x16xbf16, #tpu.memory_space<vmem>>, vector<16x16xbf16>
    %c0_1 = arith.constant 0 : index
    %c0_2 = arith.constant 0 : index
    %c0_3 = arith.constant 0 : index
    %1 = vector.load %arg1[%c0_1, %c0_2, %c0_3] : memref<1x16x256xbf16, #tpu.memory_space<vmem>>, vector<1x16x256xbf16>
    %2 = vector.shape_cast %1 : vector<1x16x256xbf16> to vector<16x256xbf16>
    %cst = arith.constant dense<0.000000e+00> : vector<16x256xf32>
    %3 = tpu.matmul %0, %2, %cst {dimension_numbers = #tpu.dot_dimension_numbers<[1], [0], [0], [1], [0, 0, 1, 1], [], []>} : vector<16x16xbf16>, vector<16x256xbf16>, vector<16x256xf32> -> vector<16x256xf32>
    %c0_4 = arith.constant 0 : index
    %c0_5 = arith.constant 0 : index
    %4 = vector.load %arg3[%c0_4, %c0_5] : memref<16x1xf32, #tpu.memory_space<vmem>>, vector<16x1xf32>
    %5 = vector.broadcast %4 : vector<16x1xf32> to vector<16x256xf32>
    %6 = arith.mulf %3, %5 : vector<16x256xf32>
    %c0_6 = arith.constant 0 : index
    %c0_7 = arith.constant 0 : index
    %7 = vector.load %arg4[%c0_6, %c0_7] : memref<16x1xf32, #tpu.memory_space<vmem>>, vector<16x1xf32>
    %8 = vector.broadcast %7 : vector<16x1xf32> to vector<16x256xf32>
    %9 = arith.addf %6, %8 : vector<16x256xf32>
    %10 = arith.negf %9 : vector<16x256xf32>
    %11 = math.exp %10 : vector<16x256xf32>
    %cst_8 = arith.constant 1.000000e+00 : f32
    %12 = vector.broadcast %cst_8 : f32 to vector<16x256xf32>
    %13 = arith.addf %12, %11 : vector<16x256xf32>
    %14 = arith.divf %12, %13 : vector<16x256xf32>
    %15 = arith.mulf %9, %14 : vector<16x256xf32>
    %16 = tpu.iota {dimensions = array<i32: 1>} : vector<1x256xi32>
    %c15_i32 = arith.constant 15 : i32
    %17 = vector.broadcast %c15_i32 : i32 to vector<1x256xi32>
    %18 = arith.andi %16, %17 : vector<1x256xi32>
    %c4_i32 = arith.constant 4 : i32
    %19 = vector.broadcast %c4_i32 : i32 to vector<1x256xi32>
    %20 = arith.shrsi %16, %19 : vector<1x256xi32>
    %c2_i32 = arith.constant 2 : i32
    %21 = vector.broadcast %c2_i32 : i32 to vector<1x256xi32>
    %22 = arith.cmpi sge, %18, %21 : vector<1x256xi32>
    %c1_i32 = arith.constant 1 : i32
    %23 = vector.broadcast %c1_i32 : i32 to vector<1x256xi32>
    %24 = arith.cmpi sge, %18, %23 : vector<1x256xi32>
    %c15_i32_9 = arith.constant 15 : i32
    %25 = vector.broadcast %c15_i32_9 : i32 to vector<1x256xi32>
    %26 = arith.cmpi slt, %18, %25 : vector<1x256xi32>
    %c14_i32 = arith.constant 14 : i32
    %27 = vector.broadcast %c14_i32 : i32 to vector<1x256xi32>
    %28 = arith.cmpi slt, %18, %27 : vector<1x256xi32>
    %c2_i32_10 = arith.constant 2 : i32
    %29 = vector.broadcast %c2_i32_10 : i32 to vector<1x256xi32>
    %30 = arith.cmpi sge, %20, %29 : vector<1x256xi32>
    %c1_i32_11 = arith.constant 1 : i32
    %31 = vector.broadcast %c1_i32_11 : i32 to vector<1x256xi32>
    %32 = arith.cmpi sge, %20, %31 : vector<1x256xi32>
    %c15_i32_12 = arith.constant 15 : i32
    %33 = vector.broadcast %c15_i32_12 : i32 to vector<1x256xi32>
    %34 = arith.cmpi slt, %20, %33 : vector<1x256xi32>
    %c14_i32_13 = arith.constant 14 : i32
    %35 = vector.broadcast %c14_i32_13 : i32 to vector<1x256xi32>
    %36 = arith.cmpi slt, %20, %35 : vector<1x256xi32>
    %37 = arith.truncf %15 : vector<16x256xf32> to vector<16x256xbf16>
    %c0_14 = arith.constant 0 : index
    %c0_15 = arith.constant 0 : index
    %38 = vector.load %arg9[%c0_14, %c0_15] : memref<64x256xbf16, #tpu.memory_space<vmem>>, vector<16x256xbf16>
    tpu.vector_store %arg9[%c0_14, %c0_15], %37 {strides = array<i32>} : memref<64x256xbf16, #tpu.memory_space<vmem>>, vector<16x256xbf16>,
    %c2_i32_16 = arith.constant 2 : i32
    %39 = tpu.dynamic_rotate %15 by %c2_i32_16 dim 1 : vector<16x256xf32>, i32 -> vector<16x256xf32>
    %cst_17 = arith.constant -1.000000e+30 : f32
    %40 = vector.shape_cast %22 : vector<1x256xi1> to vector<1x256xi1>
    %41 = vector.broadcast %40 : vector<1x256xi1> to vector<16x256xi1>
    %42 = vector.broadcast %cst_17 : f32 to vector<16x256xf32>
    %43 = arith.select %41, %39, %42 : vector<16x256xi1>, vector<16x256xf32>
    %44 = arith.maximumf %15, %43 : vector<16x256xf32>
    %c1_i32_18 = arith.constant 1 : i32
    %45 = tpu.dynamic_rotate %15 by %c1_i32_18 dim 1 : vector<16x256xf32>, i32 -> vector<16x256xf32>
    %cst_19 = arith.constant -1.000000e+30 : f32
    %46 = vector.shape_cast %24 : vector<1x256xi1> to vector<1x256xi1>
    %47 = vector.broadcast %46 : vector<1x256xi1> to vector<16x256xi1>
    %48 = vector.broadcast %cst_19 : f32 to vector<16x256xf32>
    %49 = arith.select %47, %45, %48 : vector<16x256xi1>, vector<16x256xf32>
    %50 = arith.maximumf %44, %49 : vector<16x256xf32>
    %c255_i32 = arith.constant 255 : i32
    %51 = tpu.dynamic_rotate %15 by %c255_i32 dim 1 : vector<16x256xf32>, i32 -> vector<16x256xf32>
    %cst_20 = arith.constant -1.000000e+30 : f32
    %52 = vector.shape_cast %26 : vector<1x256xi1> to vector<1x256xi1>
    %53 = vector.broadcast %52 : vector<1x256xi1> to vector<16x256xi1>
    %54 = vector.broadcast %cst_20 : f32 to vector<16x256xf32>
    %55 = arith.select %53, %51, %54 : vector<16x256xi1>, vector<16x256xf32>
    %56 = arith.maximumf %50, %55 : vector<16x256xf32>
    %c254_i32 = arith.constant 254 : i32
    %57 = tpu.dynamic_rotate %15 by %c254_i32 dim 1 : vector<16x256xf32>, i32 -> vector<16x256xf32>
    %cst_21 = arith.constant -1.000000e+30 : f32
    %58 = vector.shape_cast %28 : vector<1x256xi1> to vector<1x256xi1>
    %59 = vector.broadcast %58 : vector<1x256xi1> to vector<16x256xi1>
    %60 = vector.broadcast %cst_21 : f32 to vector<16x256xf32>
    %61 = arith.select %59, %57, %60 : vector<16x256xi1>, vector<16x256xf32>
    %62 = arith.maximumf %56, %61 : vector<16x256xf32>
    %c32_i32 = arith.constant 32 : i32
    %63 = tpu.dynamic_rotate %62 by %c32_i32 dim 1 : vector<16x256xf32>, i32 -> vector<16x256xf32>
    %cst_22 = arith.constant -1.000000e+30 : f32
    %64 = vector.shape_cast %30 : vector<1x256xi1> to vector<1x256xi1>
    %65 = vector.broadcast %64 : vector<1x256xi1> to vector<16x256xi1>
    %66 = vector.broadcast %cst_22 : f32 to vector<16x256xf32>
    %67 = arith.select %65, %63, %66 : vector<16x256xi1>, vector<16x256xf32>
    %68 = arith.maximumf %62, %67 : vector<16x256xf32>
    %c16_i32 = arith.constant 16 : i32
    %69 = tpu.dynamic_rotate %62 by %c16_i32 dim 1 : vector<16x256xf32>, i32 -> vector<16x256xf32>
    %cst_23 = arith.constant -1.000000e+30 : f32
    %70 = vector.shape_cast %32 : vector<1x256xi1> to vector<1x256xi1>
    %71 = vector.broadcast %70 : vector<1x256xi1> to vector<16x256xi1>
    %72 = vector.broadcast %cst_23 : f32 to vector<16x256xf32>
    %73 = arith.select %71, %69, %72 : vector<16x256xi1>, vector<16x256xf32>
    %74 = arith.maximumf %68, %73 : vector<16x256xf32>
    %c240_i32 = arith.constant 240 : i32
    %75 = tpu.dynamic_rotate %62 by %c240_i32 dim 1 : vector<16x256xf32>, i32 -> vector<16x256xf32>
    %cst_24 = arith.constant -1.000000e+30 : f32
    %76 = vector.shape_cast %34 : vector<1x256xi1> to vector<1x256xi1>
    %77 = vector.broadcast %76 : vector<1x256xi1> to vector<16x256xi1>
    %78 = vector.broadcast %cst_24 : f32 to vector<16x256xf32>
    %79 = arith.select %77, %75, %78 : vector<16x256xi1>, vector<16x256xf32>
    %80 = arith.maximumf %74, %79 : vector<16x256xf32>
    %c224_i32 = arith.constant 224 : i32
    %81 = tpu.dynamic_rotate %62 by %c224_i32 dim 1 : vector<16x256xf32>, i32 -> vector<16x256xf32>
    %cst_25 = arith.constant -1.000000e+30 : f32
    %82 = vector.shape_cast %36 : vector<1x256xi1> to vector<1x256xi1>
    %83 = vector.broadcast %82 : vector<1x256xi1> to vector<16x256xi1>
    %84 = vector.broadcast %cst_25 : f32 to vector<16x256xf32>
    %85 = arith.select %83, %81, %84 : vector<16x256xi1>, vector<16x256xf32>
    %86 = arith.maximumf %80, %85 : vector<16x256xf32>
    %87 = arith.truncf %86 : vector<16x256xf32> to vector<16x256xbf16>
    %c16 = arith.constant 16 : index
    %c0_26 = arith.constant 0 : index
    %88 = vector.load %arg9[%c16, %c0_26] : memref<64x256xbf16, #tpu.memory_space<vmem>>, vector<16x256xbf16>
    tpu.vector_store %arg9[%c16, %c0_26], %87 {strides = array<i32>} : memref<64x256xbf16, #tpu.memory_space<vmem>>, vector<16x256xbf16>,
    %c2_i32_27 = arith.constant 2 : i32
    %89 = tpu.dynamic_rotate %86 by %c2_i32_27 dim 1 : vector<16x256xf32>, i32 -> vector<16x256xf32>
    %cst_28 = arith.constant -1.000000e+30 : f32
    %90 = vector.shape_cast %22 : vector<1x256xi1> to vector<1x256xi1>
    %91 = vector.broadcast %90 : vector<1x256xi1> to vector<16x256xi1>
    %92 = vector.broadcast %cst_28 : f32 to vector<16x256xf32>
    %93 = arith.select %91, %89, %92 : vector<16x256xi1>, vector<16x256xf32>
    %94 = arith.maximumf %86, %93 : vector<16x256xf32>
    %c1_i32_29 = arith.constant 1 : i32
    %95 = tpu.dynamic_rotate %86 by %c1_i32_29 dim 1 : vector<16x256xf32>, i32 -> vector<16x256xf32>
    %cst_30 = arith.constant -1.000000e+30 : f32
    %96 = vector.shape_cast %24 : vector<1x256xi1> to vector<1x256xi1>
    %97 = vector.broadcast %96 : vector<1x256xi1> to vector<16x256xi1>
    %98 = vector.broadcast %cst_30 : f32 to vector<16x256xf32>
    %99 = arith.select %97, %95, %98 : vector<16x256xi1>, vector<16x256xf32>
    %100 = arith.maximumf %94, %99 : vector<16x256xf32>
    %c255_i32_31 = arith.constant 255 : i32
    %101 = tpu.dynamic_rotate %86 by %c255_i32_31 dim 1 : vector<16x256xf32>, i32 -> vector<16x256xf32>
    %cst_32 = arith.constant -1.000000e+30 : f32
    %102 = vector.shape_cast %26 : vector<1x256xi1> to vector<1x256xi1>
    %103 = vector.broadcast %102 : vector<1x256xi1> to vector<16x256xi1>
    %104 = vector.broadcast %cst_32 : f32 to vector<16x256xf32>
    %105 = arith.select %103, %101, %104 : vector<16x256xi1>, vector<16x256xf32>
    %106 = arith.maximumf %100, %105 : vector<16x256xf32>
    %c254_i32_33 = arith.constant 254 : i32
    %107 = tpu.dynamic_rotate %86 by %c254_i32_33 dim 1 : vector<16x256xf32>, i32 -> vector<16x256xf32>
    %cst_34 = arith.constant -1.000000e+30 : f32
    %108 = vector.shape_cast %28 : vector<1x256xi1> to vector<1x256xi1>
    %109 = vector.broadcast %108 : vector<1x256xi1> to vector<16x256xi1>
    %110 = vector.broadcast %cst_34 : f32 to vector<16x256xf32>
    %111 = arith.select %109, %107, %110 : vector<16x256xi1>, vector<16x256xf32>
    %112 = arith.maximumf %106, %111 : vector<16x256xf32>
    %c32_i32_35 = arith.constant 32 : i32
    %113 = tpu.dynamic_rotate %112 by %c32_i32_35 dim 1 : vector<16x256xf32>, i32 -> vector<16x256xf32>
    %cst_36 = arith.constant -1.000000e+30 : f32
    %114 = vector.shape_cast %30 : vector<1x256xi1> to vector<1x256xi1>
    %115 = vector.broadcast %114 : vector<1x256xi1> to vector<16x256xi1>
    %116 = vector.broadcast %cst_36 : f32 to vector<16x256xf32>
    %117 = arith.select %115, %113, %116 : vector<16x256xi1>, vector<16x256xf32>
    %118 = arith.maximumf %112, %117 : vector<16x256xf32>
    %c16_i32_37 = arith.constant 16 : i32
    %119 = tpu.dynamic_rotate %112 by %c16_i32_37 dim 1 : vector<16x256xf32>, i32 -> vector<16x256xf32>
    %cst_38 = arith.constant -1.000000e+30 : f32
    %120 = vector.shape_cast %32 : vector<1x256xi1> to vector<1x256xi1>
    %121 = vector.broadcast %120 : vector<1x256xi1> to vector<16x256xi1>
    %122 = vector.broadcast %cst_38 : f32 to vector<16x256xf32>
    %123 = arith.select %121, %119, %122 : vector<16x256xi1>, vector<16x256xf32>
    %124 = arith.maximumf %118, %123 : vector<16x256xf32>
    %c240_i32_39 = arith.constant 240 : i32
    %125 = tpu.dynamic_rotate %112 by %c240_i32_39 dim 1 : vector<16x256xf32>, i32 -> vector<16x256xf32>
    %cst_40 = arith.constant -1.000000e+30 : f32
    %126 = vector.shape_cast %34 : vector<1x256xi1> to vector<1x256xi1>
    %127 = vector.broadcast %126 : vector<1x256xi1> to vector<16x256xi1>
    %128 = vector.broadcast %cst_40 : f32 to vector<16x256xf32>
    %129 = arith.select %127, %125, %128 : vector<16x256xi1>, vector<16x256xf32>
    %130 = arith.maximumf %124, %129 : vector<16x256xf32>
    %c224_i32_41 = arith.constant 224 : i32
    %131 = tpu.dynamic_rotate %112 by %c224_i32_41 dim 1 : vector<16x256xf32>, i32 -> vector<16x256xf32>
    %cst_42 = arith.constant -1.000000e+30 : f32
    %132 = vector.shape_cast %36 : vector<1x256xi1> to vector<1x256xi1>
    %133 = vector.broadcast %132 : vector<1x256xi1> to vector<16x256xi1>
    %134 = vector.broadcast %cst_42 : f32 to vector<16x256xf32>
    %135 = arith.select %133, %131, %134 : vector<16x256xi1>, vector<16x256xf32>
    %136 = arith.maximumf %130, %135 : vector<16x256xf32>
    %137 = arith.truncf %136 : vector<16x256xf32> to vector<16x256xbf16>
    %c32 = arith.constant 32 : index
    %c0_43 = arith.constant 0 : index
    %138 = vector.load %arg9[%c32, %c0_43] : memref<64x256xbf16, #tpu.memory_space<vmem>>, vector<16x256xbf16>
    tpu.vector_store %arg9[%c32, %c0_43], %137 {strides = array<i32>} : memref<64x256xbf16, #tpu.memory_space<vmem>>, vector<16x256xbf16>,
    %c2_i32_44 = arith.constant 2 : i32
    %139 = tpu.dynamic_rotate %136 by %c2_i32_44 dim 1 : vector<16x256xf32>, i32 -> vector<16x256xf32>
    %cst_45 = arith.constant -1.000000e+30 : f32
    %140 = vector.shape_cast %22 : vector<1x256xi1> to vector<1x256xi1>
    %141 = vector.broadcast %140 : vector<1x256xi1> to vector<16x256xi1>
    %142 = vector.broadcast %cst_45 : f32 to vector<16x256xf32>
    %143 = arith.select %141, %139, %142 : vector<16x256xi1>, vector<16x256xf32>
    %144 = arith.maximumf %136, %143 : vector<16x256xf32>
    %c1_i32_46 = arith.constant 1 : i32
    %145 = tpu.dynamic_rotate %136 by %c1_i32_46 dim 1 : vector<16x256xf32>, i32 -> vector<16x256xf32>
    %cst_47 = arith.constant -1.000000e+30 : f32
    %146 = vector.shape_cast %24 : vector<1x256xi1> to vector<1x256xi1>
    %147 = vector.broadcast %146 : vector<1x256xi1> to vector<16x256xi1>
    %148 = vector.broadcast %cst_47 : f32 to vector<16x256xf32>
    %149 = arith.select %147, %145, %148 : vector<16x256xi1>, vector<16x256xf32>
    %150 = arith.maximumf %144, %149 : vector<16x256xf32>
    %c255_i32_48 = arith.constant 255 : i32
    %151 = tpu.dynamic_rotate %136 by %c255_i32_48 dim 1 : vector<16x256xf32>, i32 -> vector<16x256xf32>
    %cst_49 = arith.constant -1.000000e+30 : f32
    %152 = vector.shape_cast %26 : vector<1x256xi1> to vector<1x256xi1>
    %153 = vector.broadcast %152 : vector<1x256xi1> to vector<16x256xi1>
    %154 = vector.broadcast %cst_49 : f32 to vector<16x256xf32>
    %155 = arith.select %153, %151, %154 : vector<16x256xi1>, vector<16x256xf32>
    %156 = arith.maximumf %150, %155 : vector<16x256xf32>
    %c254_i32_50 = arith.constant 254 : i32
    %157 = tpu.dynamic_rotate %136 by %c254_i32_50 dim 1 : vector<16x256xf32>, i32 -> vector<16x256xf32>
    %cst_51 = arith.constant -1.000000e+30 : f32
    %158 = vector.shape_cast %28 : vector<1x256xi1> to vector<1x256xi1>
    %159 = vector.broadcast %158 : vector<1x256xi1> to vector<16x256xi1>
    %160 = vector.broadcast %cst_51 : f32 to vector<16x256xf32>
    %161 = arith.select %159, %157, %160 : vector<16x256xi1>, vector<16x256xf32>
    %162 = arith.maximumf %156, %161 : vector<16x256xf32>
    %c32_i32_52 = arith.constant 32 : i32
    %163 = tpu.dynamic_rotate %162 by %c32_i32_52 dim 1 : vector<16x256xf32>, i32 -> vector<16x256xf32>
    %cst_53 = arith.constant -1.000000e+30 : f32
    %164 = vector.shape_cast %30 : vector<1x256xi1> to vector<1x256xi1>
    %165 = vector.broadcast %164 : vector<1x256xi1> to vector<16x256xi1>
    %166 = vector.broadcast %cst_53 : f32 to vector<16x256xf32>
    %167 = arith.select %165, %163, %166 : vector<16x256xi1>, vector<16x256xf32>
    %168 = arith.maximumf %162, %167 : vector<16x256xf32>
    %c16_i32_54 = arith.constant 16 : i32
    %169 = tpu.dynamic_rotate %162 by %c16_i32_54 dim 1 : vector<16x256xf32>, i32 -> vector<16x256xf32>
    %cst_55 = arith.constant -1.000000e+30 : f32
    %170 = vector.shape_cast %32 : vector<1x256xi1> to vector<1x256xi1>
    %171 = vector.broadcast %170 : vector<1x256xi1> to vector<16x256xi1>
    %172 = vector.broadcast %cst_55 : f32 to vector<16x256xf32>
    %173 = arith.select %171, %169, %172 : vector<16x256xi1>, vector<16x256xf32>
    %174 = arith.maximumf %168, %173 : vector<16x256xf32>
    %c240_i32_56 = arith.constant 240 : i32
    %175 = tpu.dynamic_rotate %162 by %c240_i32_56 dim 1 : vector<16x256xf32>, i32 -> vector<16x256xf32>
    %cst_57 = arith.constant -1.000000e+30 : f32
    %176 = vector.shape_cast %34 : vector<1x256xi1> to vector<1x256xi1>
    %177 = vector.broadcast %176 : vector<1x256xi1> to vector<16x256xi1>
    %178 = vector.broadcast %cst_57 : f32 to vector<16x256xf32>
    %179 = arith.select %177, %175, %178 : vector<16x256xi1>, vector<16x256xf32>
    %180 = arith.maximumf %174, %179 : vector<16x256xf32>
    %c224_i32_58 = arith.constant 224 : i32
    %181 = tpu.dynamic_rotate %162 by %c224_i32_58 dim 1 : vector<16x256xf32>, i32 -> vector<16x256xf32>
    %cst_59 = arith.constant -1.000000e+30 : f32
    %182 = vector.shape_cast %36 : vector<1x256xi1> to vector<1x256xi1>
    %183 = vector.broadcast %182 : vector<1x256xi1> to vector<16x256xi1>
    %184 = vector.broadcast %cst_59 : f32 to vector<16x256xf32>
    %185 = arith.select %183, %181, %184 : vector<16x256xi1>, vector<16x256xf32>
    %186 = arith.maximumf %180, %185 : vector<16x256xf32>
    %187 = arith.truncf %186 : vector<16x256xf32> to vector<16x256xbf16>
    %c48 = arith.constant 48 : index
    %c0_60 = arith.constant 0 : index
    %188 = vector.load %arg9[%c48, %c0_60] : memref<64x256xbf16, #tpu.memory_space<vmem>>, vector<16x256xbf16>
    tpu.vector_store %arg9[%c48, %c0_60], %187 {strides = array<i32>} : memref<64x256xbf16, #tpu.memory_space<vmem>>, vector<16x256xbf16>,
    %c0_61 = arith.constant 0 : index
    %c0_62 = arith.constant 0 : index
    %189 = vector.load %arg5[%c0_61, %c0_62] : memref<16x64xbf16, #tpu.memory_space<vmem>>, vector<16x64xbf16>
    %c0_63 = arith.constant 0 : index
    %c0_64 = arith.constant 0 : index
    %190 = vector.load %arg9[%c0_63, %c0_64] : memref<64x256xbf16, #tpu.memory_space<vmem>>, vector<64x256xbf16>
    %cst_65 = arith.constant dense<0.000000e+00> : vector<16x256xf32>
    %191 = tpu.matmul %189, %190, %cst_65 {dimension_numbers = #tpu.dot_dimension_numbers<[1], [0], [0], [1], [0, 0, 1, 1], [], []>} : vector<16x64xbf16>, vector<64x256xbf16>, vector<16x256xf32> -> vector<16x256xf32>
    %c0_66 = arith.constant 0 : index
    %c0_67 = arith.constant 0 : index
    %192 = vector.load %arg6[%c0_66, %c0_67] : memref<16x1xf32, #tpu.memory_space<vmem>>, vector<16x1xf32>
    %193 = vector.broadcast %192 : vector<16x1xf32> to vector<16x256xf32>
    %194 = arith.mulf %191, %193 : vector<16x256xf32>
    %c0_68 = arith.constant 0 : index
    %c0_69 = arith.constant 0 : index
    %195 = vector.load %arg7[%c0_68, %c0_69] : memref<16x1xf32, #tpu.memory_space<vmem>>, vector<16x1xf32>
    %196 = vector.broadcast %195 : vector<16x1xf32> to vector<16x256xf32>
    %197 = arith.addf %194, %196 : vector<16x256xf32>
    %198 = arith.negf %197 : vector<16x256xf32>
    %199 = math.exp %198 : vector<16x256xf32>
    %cst_70 = arith.constant 1.000000e+00 : f32
    %200 = vector.broadcast %cst_70 : f32 to vector<16x256xf32>
    %201 = arith.addf %200, %199 : vector<16x256xf32>
    %202 = arith.divf %200, %201 : vector<16x256xf32>
    %203 = arith.mulf %197, %202 : vector<16x256xf32>
    %c0_71 = arith.constant 0 : index
    %c0_72 = arith.constant 0 : index
    %c0_73 = arith.constant 0 : index
    %204 = vector.load %arg8[%c0_71, %c0_72, %c0_73] : memref<1x16x256xf32, #tpu.memory_space<vmem>>, vector<1x16x256xf32>
    %205 = vector.shape_cast %204 : vector<1x16x256xf32> to vector<16x256xf32>
    %206 = vector.shape_cast %203 : vector<16x256xf32> to vector<1x16x256xf32>
    tpu.vector_store %arg8[%c0_71, %c0_72, %c0_73], %206 {strides = array<i32>} : memref<1x16x256xf32, #tpu.memory_space<vmem>>, vector<1x16x256xf32>,
    return
  }
  func.func @transform_0(%arg0: i32) -> (i32, i32, i32) {
    %c0_i32 = arith.constant 0 : i32
    %c0_i32_0 = arith.constant 0 : i32
    %c0_i32_1 = arith.constant 0 : i32
    return %arg0, %c0_i32, %c0_i32_0 : i32, i32, i32
  }
  func.func @transform_1(%arg0: i32) -> (i32, i32) {
    %c0_i32 = arith.constant 0 : i32
    %c0_i32_0 = arith.constant 0 : i32
    %c0_i32_1 = arith.constant 0 : i32
    return %c0_i32, %c0_i32_0 : i32, i32
  }
  func.func @transform_2(%arg0: i32) -> (i32, i32) {
    %c0_i32 = arith.constant 0 : i32
    %c0_i32_0 = arith.constant 0 : i32
    %c0_i32_1 = arith.constant 0 : i32
    return %c0_i32, %c0_i32_0 : i32, i32
  }
  func.func @transform_3(%arg0: i32) -> (i32, i32) {
    %c0_i32 = arith.constant 0 : i32
    %c0_i32_0 = arith.constant 0 : i32
    %c0_i32_1 = arith.constant 0 : i32
    return %c0_i32, %c0_i32_0 : i32, i32
  }
  func.func @transform_4(%arg0: i32) -> (i32, i32) {
    %c0_i32 = arith.constant 0 : i32
    %c0_i32_0 = arith.constant 0 : i32
    %c0_i32_1 = arith.constant 0 : i32
    return %c0_i32, %c0_i32_0 : i32, i32
  }
  func.func @transform_5(%arg0: i32) -> (i32, i32) {
    %c0_i32 = arith.constant 0 : i32
    %c0_i32_0 = arith.constant 0 : i32
    %c0_i32_1 = arith.constant 0 : i32
    return %c0_i32, %c0_i32_0 : i32, i32
  }
  func.func @transform_6(%arg0: i32) -> (i32, i32) {
    %c0_i32 = arith.constant 0 : i32
    %c0_i32_0 = arith.constant 0 : i32
    %c0_i32_1 = arith.constant 0 : i32
    return %c0_i32, %c0_i32_0 : i32, i32
  }
  func.func @transform_7(%arg0: i32) -> (i32, i32, i32) {
    %c0_i32 = arith.constant 0 : i32
    %c0_i32_0 = arith.constant 0 : i32
    %c0_i32_1 = arith.constant 0 : i32
    return %arg0, %c0_i32, %c0_i32_0 : i32, i32, i32
  }
}

</mosaic_0001>

<llo_original>
// kernel: spp_forward.1
$region0: #{spp_forward.1}
  #allocation0 [shape = 'u32[]', space=smem, size = 0x4, offset = 0x4, fixed_abs, tag = 'smem constant byte address 0x4 - core index']
  #allocation1 [shape = 'u32[144,128]{1,0:T(1,128)}', space=vmem, size = 0x12000, scoped, tag = 'internal scratch']
  #allocation2 [shape = 'bf16[64,256]{1,0:T(16,128)(2,1)}', space=vmem, size = 0x8000, scoped, tag = 'scratch operand']
  %s0 = inlined_call_operand.vmem [shape: bf16[2,16,256], index: 0, kind: input, shape index: {}]
  %s1 = inlined_call_operand.vmem [shape: bf16[16,16], index: 1, kind: input, shape index: {}]
  %s2 = inlined_call_operand.vmem [shape: f32[16,1], index: 2, kind: input, shape index: {}]
  %s3 = inlined_call_operand.vmem [shape: f32[16,1], index: 3, kind: input, shape index: {}]
  %s4 = inlined_call_operand.vmem [shape: bf16[16,64], index: 4, kind: input, shape index: {}]
  %s5 = inlined_call_operand.vmem [shape: f32[16,1], index: 5, kind: input, shape index: {}]
  %s6 = inlined_call_operand.vmem [shape: f32[16,1], index: 6, kind: input, shape index: {}]
  %s7 = inlined_call_operand.vmem [shape: f32[2,16,256], index: 7, kind: output, shape index: {}]
  %s8 = sld [smem:[#allocation0]]
  $region61: #{spp_forward.1} parent=0
    _
  %s10 = ssub.s32 1, %s8
  %s11 = scalar_select 0, %s10, %s8
  loop: start=0, step=1, limit=4
  $region2: #{spp_forward.1} parent=0 // loop_pre_header
    _
  $region3: #{spp_forward.1} parent=0 // loop_header
    %s13 = sphi 0, %s17
    %p14 = scmp.ge.s32.totalorder %s13, 4
    %s23 = sphi 0, %s25
    %s26 = sphi 0, %s23
    %s27 = sphi 0, %s26
    %s43 = sphi 0, %s27
    %s47 = sphi 0, %s47
    %s49 = sphi 0, %s47
    %s50 = sphi 0, %s49
    %s64 = sphi 0, %s50
    %s68 = sphi 0, %s68
    %s70 = sphi 0, %s68
    %s71 = sphi 0, %s70
    %s85 = sphi 0, %s71
    %s89 = sphi 0, %s89
    %s91 = sphi 0, %s89
    %s92 = sphi 0, %s91
    %s106 = sphi 0, %s92
    %s110 = sphi 0, %s110
    %s112 = sphi 0, %s110
    %s113 = sphi 0, %s112
    %s127 = sphi 0, %s113
    %s131 = sphi 0, %s131
    %s133 = sphi 0, %s131
    %s134 = sphi 0, %s133
    %s148 = sphi 0, %s134
    %s152 = sphi 0, %s152
    %s154 = sphi 0, %s152
    %s155 = sphi 0, %s154
    %s169 = sphi 0, %s155
    %s175 = sphi 0, %s177
    %s178 = sphi 0, %s175
    %s179 = sphi 0, %s178
    %s195 = sphi 0, %s179
  $region4: #{spp_forward.1} parent=0 // loop_header_branch
    %16 = sbr.rel (%p14) target = $region8
  $region5: #{spp_forward.1} parent=0 // loop_body
    %s18 = ssub.s32 %s13, 1
    %s19 = ssub.s32 %s13, 2
    %s20 = sadd.s32 %s13, 1
    %s21 = ssub.s32 %s13, %s20
    %p22 = scmp.eq.s32.totalorder %s21, 0
    %s24 = sadd.s32 %s23, 1
    %s25 = scalar_select %p22, %s23, %s24
    %p28 = pneg %p22
    %p29 = scmp.eq.s32.totalorder %s13, 1
    %p30 = por %p28, %p29
    %p31 = scmp.ne.s32.totalorder %s23, %s26
    %p32 = scmp.eq.s32.totalorder %s13, 0
    %p33 = por %p31, %p32
    %p34 = scmp.ne.s32.totalorder %s23, %s26
    %p35 = scmp.eq.s32.totalorder %s18, 1
    %p36 = por %p34, %p35
    %p37 = scmp.ne.s32.totalorder %s26, %s27
    %p38 = scmp.eq.s32.totalorder %s18, 0
    %p39 = por %p37, %p38
    %p40 = scmp.ne.s32.totalorder %s26, %s27
    %p41 = scmp.eq.s32.totalorder %s19, 1
    %p42 = por %p40, %p41
    %p44 = scmp.ne.s32.totalorder %s27, %s43
    %p45 = scmp.eq.s32.totalorder %s19, 0
    %p46 = por %p44, %p45
    %s48 = sadd.s32 %s47, 1
    %p51 = scmp.eq.s32.totalorder %s13, 1
    %p52 = scmp.ne.s32.totalorder %s47, %s49
    %p53 = scmp.eq.s32.totalorder %s13, 0
    %p54 = por %p52, %p53
    %p55 = scmp.ne.s32.totalorder %s47, %s49
    %p56 = scmp.eq.s32.totalorder %s18, 1
    %p57 = por %p55, %p56
    %p58 = scmp.ne.s32.totalorder %s49, %s50
    %p59 = scmp.eq.s32.totalorder %s18, 0
    %p60 = por %p58, %p59
    %p61 = scmp.ne.s32.totalorder %s49, %s50
    %p62 = scmp.eq.s32.totalorder %s19, 1
    %p63 = por %p61, %p62
    %p65 = scmp.ne.s32.totalorder %s50, %s64
    %p66 = scmp.eq.s32.totalorder %s19, 0
    %p67 = por %p65, %p66
    %s69 = sadd.s32 %s68, 1
    %p72 = scmp.eq.s32.totalorder %s13, 1
    %p73 = scmp.ne.s32.totalorder %s68, %s70
    %p74 = scmp.eq.s32.totalorder %s13, 0
    %p75 = por %p73, %p74
    %p76 = scmp.ne.s32.totalorder %s68, %s70
    %p77 = scmp.eq.s32.totalorder %s18, 1
    %p78 = por %p76, %p77
    %p79 = scmp.ne.s32.totalorder %s70, %s71
    %p80 = scmp.eq.s32.totalorder %s18, 0
    %p81 = por %p79, %p80
    %p82 = scmp.ne.s32.totalorder %s70, %s71
    %p83 = scmp.eq.s32.totalorder %s19, 1
    %p84 = por %p82, %p83
    %p86 = scmp.ne.s32.totalorder %s71, %s85
    %p87 = scmp.eq.s32.totalorder %s19, 0
    %p88 = por %p86, %p87
    %s90 = sadd.s32 %s89, 1
    %p93 = scmp.eq.s32.totalorder %s13, 1
    %p94 = scmp.ne.s32.totalorder %s89, %s91
    %p95 = scmp.eq.s32.totalorder %s13, 0
    %p96 = por %p94, %p95
    %p97 = scmp.ne.s32.totalorder %s89, %s91
    %p98 = scmp.eq.s32.totalorder %s18, 1
    %p99 = por %p97, %p98
    %p100 = scmp.ne.s32.totalorder %s91, %s92
    %p101 = scmp.eq.s32.totalorder %s18, 0
    %p102 = por %p100, %p101
    %p103 = scmp.ne.s32.totalorder %s91, %s92
    %p104 = scmp.eq.s32.totalorder %s19, 1
    %p105 = por %p103, %p104
    %p107 = scmp.ne.s32.totalorder %s92, %s106
    %p108 = scmp.eq.s32.totalorder %s19, 0
    %p109 = por %p107, %p108
    %s111 = sadd.s32 %s110, 1
    %p114 = scmp.eq.s32.totalorder %s13, 1
    %p115 = scmp.ne.s32.totalorder %s110, %s112
    %p116 = scmp.eq.s32.totalorder %s13, 0
    %p117 = por %p115, %p116
    %p118 = scmp.ne.s32.totalorder %s110, %s112
    %p119 = scmp.eq.s32.totalorder %s18, 1
    %p120 = por %p118, %p119
    %p121 = scmp.ne.s32.totalorder %s112, %s113
    %p122 = scmp.eq.s32.totalorder %s18, 0
    %p123 = por %p121, %p122
    %p124 = scmp.ne.s32.totalorder %s112, %s113
    %p125 = scmp.eq.s32.totalorder %s19, 1
    %p126 = por %p124, %p125
    %p128 = scmp.ne.s32.totalorder %s113, %s127
    %p129 = scmp.eq.s32.totalorder %s19, 0
    %p130 = por %p128, %p129
    %s132 = sadd.s32 %s131, 1
    %p135 = scmp.eq.s32.totalorder %s13, 1
    %p136 = scmp.ne.s32.totalorder %s131, %s133
    %p137 = scmp.eq.s32.totalorder %s13, 0
    %p138 = por %p136, %p137
    %p139 = scmp.ne.s32.totalorder %s131, %s133
    %p140 = scmp.eq.s32.totalorder %s18, 1
    %p141 = por %p139, %p140
    %p142 = scmp.ne.s32.totalorder %s133, %s134
    %p143 = scmp.eq.s32.totalorder %s18, 0
    %p144 = por %p142, %p143
    %p145 = scmp.ne.s32.totalorder %s133, %s134
    %p146 = scmp.eq.s32.totalorder %s19, 1
    %p147 = por %p145, %p146
    %p149 = scmp.ne.s32.totalorder %s134, %s148
    %p150 = scmp.eq.s32.totalorder %s19, 0
    %p151 = por %p149, %p150
    %s153 = sadd.s32 %s152, 1
    %p156 = scmp.eq.s32.totalorder %s13, 1
    %p157 = scmp.ne.s32.totalorder %s152, %s154
    %p158 = scmp.eq.s32.totalorder %s13, 0
    %p159 = por %p157, %p158
    %p160 = scmp.ne.s32.totalorder %s152, %s154
    %p161 = scmp.eq.s32.totalorder %s18, 1
    %p162 = por %p160, %p161
    %p163 = scmp.ne.s32.totalorder %s154, %s155
    %p164 = scmp.eq.s32.totalorder %s18, 0
    %p165 = por %p163, %p164
    %p166 = scmp.ne.s32.totalorder %s154, %s155
    %p167 = scmp.eq.s32.totalorder %s19, 1
    %p168 = por %p166, %p167
    %p170 = scmp.ne.s32.totalorder %s155, %s169
    %p171 = scmp.eq.s32.totalorder %s19, 0
    %p172 = por %p170, %p171
    %s173 = ssub.s32 %s13, %s20
    %p174 = scmp.eq.s32.totalorder %s173, 0
    %s176 = sadd.s32 %s175, 1
    %s177 = scalar_select %p174, %s175, %s176
    %p180 = pneg %p174
    %p181 = scmp.eq.s32.totalorder %s13, 1
    %p182 = por %p180, %p181
    %p183 = scmp.ne.s32.totalorder %s175, %s178
    %p184 = scmp.eq.s32.totalorder %s13, 0
    %p185 = por %p183, %p184
    %p186 = scmp.ne.s32.totalorder %s175, %s178
    %p187 = scmp.eq.s32.totalorder %s18, 1
    %p188 = por %p186, %p187
    %p189 = scmp.ne.s32.totalorder %s178, %s179
    %p190 = scmp.eq.s32.totalorder %s18, 0
    %p191 = por %p189, %p190
    %p192 = scmp.ne.s32.totalorder %s178, %s179
    %p193 = scmp.eq.s32.totalorder %s19, 1
    %p194 = por %p192, %p193
    %p196 = scmp.ne.s32.totalorder %s179, %s195
    %p197 = scmp.eq.s32.totalorder %s19, 0
    %p198 = por %p196, %p197
    %p199 = scmp.le.s32.totalorder 1, %s13
    %p200 = scmp.lt.s32.totalorder %s13, 3
    %p201 = pnand %p199, %p200
    %p202 = pneg %p201
    // Predicated region
    $region9: #{spp_forward.1} parent=5 // pred_check
      _
    $region10: #{spp_forward.1} parent=5 // pred_check_branch
      %204 = sbr.rel (%p201) target = $region12
    $region11: #{spp_forward.1} parent=5 // pred_region
      %s205 = ssub.s32 %s13, 1
      // Predicated region
      $region13: #{spp_forward.1} parent=11 // pred_check
        %p206 = pneg %p60
      $region14: #{spp_forward.1} parent=11 // pred_check_branch
        %208 = sbr.rel (%p206) target = $region16
      $region15: #{spp_forward.1} parent=11 // pred_region
        _
      $region16: #{spp_forward.1} parent=11 // pred_fallthru
        _
      // Predicated region
      $region17: #{spp_forward.1} parent=11 // pred_check
        %p209 = pneg %p81
      $region18: #{spp_forward.1} parent=11 // pred_check_branch
        %211 = sbr.rel (%p209) target = $region20
      $region19: #{spp_forward.1} parent=11 // pred_region
        _
      $region20: #{spp_forward.1} parent=11 // pred_fallthru
        _
      // Predicated region
      $region21: #{spp_forward.1} parent=11 // pred_check
        %p212 = pneg %p102
      $region22: #{spp_forward.1} parent=11 // pred_check_branch
        %214 = sbr.rel (%p212) target = $region24
      $region23: #{spp_forward.1} parent=11 // pred_region
        _
      $region24: #{spp_forward.1} parent=11 // pred_fallthru
        _
      // Predicated region
      $region25: #{spp_forward.1} parent=11 // pred_check
        %p215 = pneg %p123
      $region26: #{spp_forward.1} parent=11 // pred_check_branch
        %217 = sbr.rel (%p215) target = $region28
      $region27: #{spp_forward.1} parent=11 // pred_region
        _
      $region28: #{spp_forward.1} parent=11 // pred_fallthru
        _
      // Predicated region
      $region29: #{spp_forward.1} parent=11 // pred_check
        %p218 = pneg %p144
      $region30: #{spp_forward.1} parent=11 // pred_check_branch
        %220 = sbr.rel (%p218) target = $region32
      $region31: #{spp_forward.1} parent=11 // pred_region
        _
      $region32: #{spp_forward.1} parent=11 // pred_fallthru
        _
      // Predicated region
      $region33: #{spp_forward.1} parent=11 // pred_check
        %p221 = pneg %p165
      $region34: #{spp_forward.1} parent=11 // pred_check_branch
        %223 = sbr.rel (%p221) target = $region36
      $region35: #{spp_forward.1} parent=11 // pred_region
        _
      $region36: #{spp_forward.1} parent=11 // pred_fallthru
        _
    $region12: #{spp_forward.1} parent=5 // pred_fallthru
      _
    %p224 = scmp.lt.s32.totalorder %s13, 2
    // Predicated region
    $region37: #{spp_forward.1} parent=5 // pred_check
      %p225 = pneg %p224
    $region38: #{spp_forward.1} parent=5 // pred_check_branch
      %227 = sbr.rel (%p225) target = $region40
    $region39: #{spp_forward.1} parent=5 // pred_region
      // Predicated region
      $region41: #{spp_forward.1} parent=39 // pred_check
        %p228 = pneg %p33
      $region42: #{spp_forward.1} parent=39 // pred_check_branch
        %230 = sbr.rel (%p228) target = $region44
      $region43: #{spp_forward.1} parent=39 // pred_region
        %p231 = scmp.lt.s32.totalorder %s13, 1
        %s232 = scalar_select %p231, %s13, 1
        %s233 = smul.addr %s232, 4
        %s234 = smul.addr %s233, 4
        %s235 = scalar_lea.vmem %s0, %s234
      $region44: #{spp_forward.1} parent=39 // pred_fallthru
        _
    $region40: #{spp_forward.1} parent=5 // pred_fallthru
      _
    %p236 = scmp.le.s32.totalorder 1, %s13
    %p237 = scmp.lt.s32.totalorder %s13, 3
    %p238 = pnand %p236, %p237
    %p239 = pneg %p238
    // Predicated region
    $region45: #{spp_forward.1} parent=5 // pred_check
      _
    $region46: #{spp_forward.1} parent=5 // pred_check_branch
      %241 = sbr.rel (%p238) target = $region48
    $region47: #{spp_forward.1} parent=5 // pred_region
      %s242 = ssub.s32 %s13, 1
      %p243 = scmp.lt.s32.totalorder %s18, 1
      %s244 = scalar_select %p243, %s18, 1
      %s245 = smul.addr %s244, 4
      %s246 = smul.addr %s245, 4
      %s247 = scalar_lea.vmem %s0, %s246
      %p248 = pneg %p39
      %p249 = pneg %p36
      %p250 = pneg %p60
      %p251 = pneg %p57
      %p252 = pneg %p81
      %p253 = pneg %p78
      %p254 = pneg %p102
      %p255 = pneg %p99
      %p256 = pneg %p123
      %p257 = pneg %p120
      %p258 = pneg %p144
      %p259 = pneg %p141
      %p260 = pneg %p165
      %p261 = pneg %p162
      %p262 = pneg %p191
      %p263 = pneg %p188
      %p264 = scmp.lt.s32.totalorder %s18, 1
      %s265 = scalar_select %p264, %s18, 1
      %s266 = smul.addr %s265, 4
      %s267 = smul.addr %s266, 8
      %s268 = scalar_lea.vmem %s7, %s267
      %p269 = scmp.lt.s32.totalorder %s18, 1
      %s270 = scalar_select %p269, %s18, 1
      %s271 = smul.addr %s270, 4
      %s272 = smul.addr %s271, 4
      %s273 = scalar_lea.vmem %s0, %s272
      %p274 = scmp.lt.s32.totalorder %s18, 1
      %s275 = scalar_select %p274, %s18, 1
      %s276 = smul.addr %s275, 4
      %s277 = smul.addr %s276, 8
      %s278 = scalar_lea.vmem %s7, %s277
      %v280 = vld [vmem:[%s1] sm:$0xf]
      %v281 = vld [vmem:[%s1 + $0x4] sm:$0xf]
      %v282 = vld [vmem:[%s273] sm:$0xff]
      %v283 = vld [vmem:[%s273 + $0x8] sm:$0xff]
      %v286 = vunpack.c.l.b16 %v280
      %v287 = vunpack.c.l.b16 %v281
      %v288 = vpack.c.b16 %v287, %v286
      %v291 = vunpack.c.l.b16 %v282
      %v292 = vunpack.c.h.b16 %v282
      %v293 = vunpack.c.l.b16 %v283
      %v294 = vunpack.c.h.b16 %v283
      %v295 = vpack.c.b16 %v293, %v291
      %v296 = vpack.c.b16 %v294, %v292
      %vm299 = vcmask 130048
      %v301 = vsel %vm299, %v288, 0
      %303 = vmatprep.subr.bf16.mxu0 %v296
      %304 = vmatpush1.bf16.msra.mxu0 %v295
      %305 = vmatprep.subr.bf16.mxu0 0
      %306 = vmatpush1.bf16.msra.mxu0 0
      %307 = vmatprep.subr.bf16.mxu0 0
      %308 = vmatpush1.bf16.msra.mxu0 0
      %309 = vmatprep.subr.bf16.mxu0 0
      %310 = vmatpush1.bf16.msra.mxu0 0
      %311 = vmatprep.subr.bf16.mxu0 0
      %312 = vmatpush1.bf16.msra.mxu0 0
      %313 = vmatprep.subr.bf16.mxu0 0
      %314 = vmatpush1.bf16.msra.mxu0 0
      %315 = vmatprep.subr.bf16.mxu0 0
      %316 = vmatpush1.bf16.msra.mxu0 0
      %317 = vmatprep.subr.bf16.mxu0 0
      %318 = vmatpush1.bf16.msra.mxu0 0
      %319 = vmatprep.subr.bf16.mxu0 0
      %320 = vmatpush1.bf16.msra.mxu0 0
      %321 = vmatprep.subr.bf16.mxu0 0
      %322 = vmatpush1.bf16.msra.mxu0 0
      %323 = vmatprep.subr.bf16.mxu0 0
      %324 = vmatpush1.bf16.msra.mxu0 0
      %325 = vmatprep.subr.bf16.mxu0 0
      %326 = vmatpush1.bf16.msra.mxu0 0
      %327 = vmatprep.subr.bf16.mxu0 0
      %328 = vmatpush1.bf16.msra.mxu0 0
      %329 = vmatprep.subr.bf16.mxu0 0
      %330 = vmatpush1.bf16.msra.mxu0 0
      %331 = vmatprep.subr.bf16.mxu0 0
      %332 = vmatpush1.bf16.msra.mxu0 0
      %333 = vmatprep.subr.bf16.mxu0 0
      %334 = vmatpush1.bf16.msra.mxu0 0
      %335 = vmatprep.mubr.bf16.mxu0 0
      %336 = vmatmul.mubr.bf16.gmra.mrb[0].mxu0 %v301
      %v337 = vpop.f32.mrb[0].mxu0
      %v338 = vadd.f32 0.0, %v337
      %v339 = vpop.f32.mrb[0].mxu0
      %v340 = vadd.f32 0.0, %v339
      %v341 = vpop.f32.mrb[0].mxu0
      %v342 = vadd.f32 0.0, %v341
      %v343 = vpop.f32.mrb[0].mxu0
      %v344 = vadd.f32 0.0, %v343
      %345 = vdwg.mxu0
      %v346 = vld [vmem:[%s2] sm:$0xff]
      %v347 = vld [vmem:[%s2 + $0x8] sm:$0xff]
      %349 = vset.pattern.permute.xlu0 0
      %350 = vperm.xlu0 %349, %v346
      %v351 = vpop.permute.xlu0 %350
      %354 = vset.pattern.permute.xlu0 0
      %355 = vperm.xlu0 %354, %v347
      %v356 = vpop.permute.xlu0 %355
      %v358 = vmul.f32 %v338, %v351
      %v359 = vmul.f32 %v340, %v351
      %v360 = vmul.f32 %v342, %v356
      %v361 = vmul.f32 %v344, %v356
      %v362 = vld [vmem:[%s3] sm:$0xff]
      %v363 = vld [vmem:[%s3 + $0x8] sm:$0xff]
      %365 = vset.pattern.permute.xlu0 0
      %366 = vperm.xlu0 %365, %v362
      %v367 = vpop.permute.xlu0 %366
      %370 = vset.pattern.permute.xlu0 0
      %371 = vperm.xlu0 %370, %v363
      %v372 = vpop.permute.xlu0 %371
      %v374 = vadd.f32 %v358, %v367
      %v375 = vadd.f32 %v359, %v367
      %v376 = vadd.f32 %v360, %v372
      %v377 = vadd.f32 %v361, %v372
      %v378 = vxor.u32 %v374, 2147483648
      %v379 = vxor.u32 %v375, 2147483648
      %v380 = vxor.u32 %v376, 2147483648
      %v381 = vxor.u32 %v377, 2147483648
      %v382 = vmul.f32 %v378, 1.442695
      %v383 = vpow.pop %v382
      %v384 = vmul.f32 %v379, 1.442695
      %v385 = vpow.pop %v384
      %v386 = vmul.f32 %v380, 1.442695
      %v387 = vpow.pop %v386
      %v388 = vmul.f32 %v381, 1.442695
      %v389 = vpow.pop %v388
      %v390 = vadd.f32 %v383, 1.0
      %v391 = vadd.f32 %v385, 1.0
      %v392 = vadd.f32 %v387, 1.0
      %v393 = vadd.f32 %v389, 1.0
      %v394 = vrcp.pop %v390
      %v395 = vmul.f32 1.0, %v394
      %v396 = vrcp.pop %v391
      %v397 = vmul.f32 1.0, %v396
      %v398 = vrcp.pop %v392
      %v399 = vmul.f32 1.0, %v398
      %v400 = vrcp.pop %v393
      %v401 = vmul.f32 1.0, %v400
      %v402 = vmul.f32 %v374, %v395
      %v403 = vmul.f32 %v375, %v397
      %v404 = vmul.f32 %v376, %v399
      %v405 = vmul.f32 %v377, %v401
      %v406 = vlaneseq
      %v407 = vand.u32 %v406, 127
      %v408 = vadd.s32 %v407, 128
      %v409 = vand.u32 %v407, 15
      %v410 = vand.u32 %v408, 15
      %v411 = vshra.s32 %v407, 4
      %v412 = vshra.s32 %v408, 4
      %vm413 = vcmp.ge.s32.totalorder %v409, 2
      %vm414 = vcmp.ge.s32.totalorder %v410, 2
      %vm415 = vcmp.ge.s32.totalorder %v409, 1
      %vm416 = vcmp.ge.s32.totalorder %v410, 1
      %vm417 = vcmp.lt.s32.totalorder %v409, 15
      %vm418 = vcmp.lt.s32.totalorder %v410, 15
      %vm419 = vcmp.lt.s32.totalorder %v409, 14
      %vm420 = vcmp.lt.s32.totalorder %v410, 14
      %vm421 = vcmp.ge.s32.totalorder %v411, 2
      %vm422 = vcmp.ge.s32.totalorder %v412, 2
      %vm423 = vcmp.ge.s32.totalorder %v411, 1
      %vm424 = vcmp.ge.s32.totalorder %v412, 1
      %vm425 = vcmp.lt.s32.totalorder %v411, 15
      %vm426 = vcmp.lt.s32.totalorder %v412, 15
      %vm427 = vcmp.lt.s32.totalorder %v411, 14
      %vm428 = vcmp.lt.s32.totalorder %v412, 14
      %v429 = vpack.c.bf16 %v404, %v402
      %v430 = vpack.c.bf16 %v405, %v403
      %431 = vst [vmem:[#allocation2] sm:$0xff] %v429
      %432 = vst [vmem:[#allocation2 + $0x8] sm:$0xff] %v430
      %433 = vrot.lane.b32.xlu0 %v402, 2
      %v434 = vpop.permute.xlu0 %433
      %435 = vrot.lane.b32.xlu0 %v404, 2
      %v436 = vpop.permute.xlu0 %435
      %437 = vrot.lane.b32.xlu0 %v403, 2
      %v438 = vpop.permute.xlu0 %437
      %439 = vrot.lane.b32.xlu0 %v405, 2
      %v440 = vpop.permute.xlu0 %439
      %vm441 = vcmp.lt.s32.totalorder %v407, 2
      %v442 = vsel %vm441, %v434, %v438
      %v443 = vsel %vm441, %v436, %v440
      %v444 = vsel %vm441, %v438, %v434
      %v445 = vsel %vm441, %v440, %v436
      %v446 = vsel %vm413, 1, 0
      %v447 = vsel %vm414, 1, 0
      %vm448 = vcmp.eq.s32.totalorder %v446, 1
      %vm449 = vcmp.eq.s32.totalorder %v447, 1
      %v450 = vsel %vm448, %v444, -1e+30
      %v451 = vsel %vm449, %v442, -1e+30
      %v452 = vsel %vm448, %v445, -1e+30
      %v453 = vsel %vm449, %v443, -1e+30
      %v454 = vmax.f32 %v402, %v450
      %v455 = vmax.f32 %v403, %v451
      %v456 = vmax.f32 %v404, %v452
      %v457 = vmax.f32 %v405, %v453
      %458 = vrot.lane.b32.xlu0 %v402, 1
      %v459 = vpop.permute.xlu0 %458
      %460 = vrot.lane.b32.xlu0 %v404, 1
      %v461 = vpop.permute.xlu0 %460
      %462 = vrot.lane.b32.xlu0 %v403, 1
      %v463 = vpop.permute.xlu0 %462
      %464 = vrot.lane.b32.xlu0 %v405, 1
      %v465 = vpop.permute.xlu0 %464
      %vm466 = vcmp.lt.s32.totalorder %v407, 1
      %v467 = vsel %vm466, %v459, %v463
      %v468 = vsel %vm466, %v461, %v465
      %v469 = vsel %vm466, %v463, %v459
      %v470 = vsel %vm466, %v465, %v461
      %v471 = vsel %vm415, 1, 0
      %v472 = vsel %vm416, 1, 0
      %vm473 = vcmp.eq.s32.totalorder %v471, 1
      %vm474 = vcmp.eq.s32.totalorder %v472, 1
      %v475 = vsel %vm473, %v469, -1e+30
      %v476 = vsel %vm474, %v467, -1e+30
      %v477 = vsel %vm473, %v470, -1e+30
      %v478 = vsel %vm474, %v468, -1e+30
      %v479 = vmax.f32 %v454, %v475
      %v480 = vmax.f32 %v455, %v476
      %v481 = vmax.f32 %v456, %v477
      %v482 = vmax.f32 %v457, %v478
      %483 = vrot.lane.b32.xlu0 %v402, 127
      %v484 = vpop.permute.xlu0 %483
      %485 = vrot.lane.b32.xlu0 %v404, 127
      %v486 = vpop.permute.xlu0 %485
      %487 = vrot.lane.b32.xlu0 %v403, 127
      %v488 = vpop.permute.xlu0 %487
      %489 = vrot.lane.b32.xlu0 %v405, 127
      %v490 = vpop.permute.xlu0 %489
      %vm491 = vcmp.lt.s32.totalorder %v407, 127
      %v492 = vsel %vm491, %v484, %v488
      %v493 = vsel %vm491, %v486, %v490
      %v494 = vsel %vm491, %v488, %v484
      %v495 = vsel %vm491, %v490, %v486
      %v496 = vsel %vm417, 1, 0
      %v497 = vsel %vm418, 1, 0
      %vm498 = vcmp.eq.s32.totalorder %v496, 1
      %vm499 = vcmp.eq.s32.totalorder %v497, 1
      %v500 = vsel %vm498, %v492, -1e+30
      %v501 = vsel %vm499, %v494, -1e+30
      %v502 = vsel %vm498, %v493, -1e+30
      %v503 = vsel %vm499, %v495, -1e+30
      %v504 = vmax.f32 %v479, %v500
      %v505 = vmax.f32 %v480, %v501
      %v506 = vmax.f32 %v481, %v502
      %v507 = vmax.f32 %v482, %v503
      %508 = vrot.lane.b32.xlu0 %v402, 126
      %v509 = vpop.permute.xlu0 %508
      %510 = vrot.lane.b32.xlu0 %v404, 126
      %v511 = vpop.permute.xlu0 %510
      %512 = vrot.lane.b32.xlu0 %v403, 126
      %v513 = vpop.permute.xlu0 %512
      %514 = vrot.lane.b32.xlu0 %v405, 126
      %v515 = vpop.permute.xlu0 %514
      %vm516 = vcmp.lt.s32.totalorder %v407, 126
      %v517 = vsel %vm516, %v509, %v513
      %v518 = vsel %vm516, %v511, %v515
      %v519 = vsel %vm516, %v513, %v509
      %v520 = vsel %vm516, %v515, %v511
      %v521 = vsel %vm419, 1, 0
      %v522 = vsel %vm420, 1, 0
      %vm523 = vcmp.eq.s32.totalorder %v521, 1
      %vm524 = vcmp.eq.s32.totalorder %v522, 1
      %v525 = vsel %vm523, %v517, -1e+30
      %v526 = vsel %vm524, %v519, -1e+30
      %v527 = vsel %vm523, %v518, -1e+30
      %v528 = vsel %vm524, %v520, -1e+30
      %v529 = vmax.f32 %v504, %v525
      %v530 = vmax.f32 %v505, %v526
      %v531 = vmax.f32 %v506, %v527
      %v532 = vmax.f32 %v507, %v528
      %533 = vrot.lane.b32.xlu0 %v529, 32
      %v534 = vpop.permute.xlu0 %533
      %535 = vrot.lane.b32.xlu0 %v531, 32
      %v536 = vpop.permute.xlu0 %535
      %537 = vrot.lane.b32.xlu0 %v530, 32
      %v538 = vpop.permute.xlu0 %537
      %539 = vrot.lane.b32.xlu0 %v532, 32
      %v540 = vpop.permute.xlu0 %539
      %vm541 = vcmp.lt.s32.totalorder %v407, 32
      %v542 = vsel %vm541, %v534, %v538
      %v543 = vsel %vm541, %v536, %v540
      %v544 = vsel %vm541, %v538, %v534
      %v545 = vsel %vm541, %v540, %v536
      %v546 = vsel %vm421, 1, 0
      %v547 = vsel %vm422, 1, 0
      %vm548 = vcmp.eq.s32.totalorder %v546, 1
      %vm549 = vcmp.eq.s32.totalorder %v547, 1
      %v550 = vsel %vm548, %v544, -1e+30
      %v551 = vsel %vm549, %v542, -1e+30
      %v552 = vsel %vm548, %v545, -1e+30
      %v553 = vsel %vm549, %v543, -1e+30
      %v554 = vmax.f32 %v529, %v550
      %v555 = vmax.f32 %v530, %v551
      %v556 = vmax.f32 %v531, %v552
      %v557 = vmax.f32 %v532, %v553
      %558 = vrot.lane.b32.xlu0 %v529, 16
      %v559 = vpop.permute.xlu0 %558
      %560 = vrot.lane.b32.xlu0 %v531, 16
      %v561 = vpop.permute.xlu0 %560
      %562 = vrot.lane.b32.xlu0 %v530, 16
      %v563 = vpop.permute.xlu0 %562
      %564 = vrot.lane.b32.xlu0 %v532, 16
      %v565 = vpop.permute.xlu0 %564
      %vm566 = vcmp.lt.s32.totalorder %v407, 16
      %v567 = vsel %vm566, %v559, %v563
      %v568 = vsel %vm566, %v561, %v565
      %v569 = vsel %vm566, %v563, %v559
      %v570 = vsel %vm566, %v565, %v561
      %v571 = vsel %vm423, 1, 0
      %v572 = vsel %vm424, 1, 0
      %vm573 = vcmp.eq.s32.totalorder %v571, 1
      %vm574 = vcmp.eq.s32.totalorder %v572, 1
      %v575 = vsel %vm573, %v569, -1e+30
      %v576 = vsel %vm574, %v567, -1e+30
      %v577 = vsel %vm573, %v570, -1e+30
      %v578 = vsel %vm574, %v568, -1e+30
      %v579 = vmax.f32 %v554, %v575
      %v580 = vmax.f32 %v555, %v576
      %v581 = vmax.f32 %v556, %v577
      %v582 = vmax.f32 %v557, %v578
      %583 = vrot.lane.b32.xlu0 %v529, 112
      %v584 = vpop.permute.xlu0 %583
      %585 = vrot.lane.b32.xlu0 %v531, 112
      %v586 = vpop.permute.xlu0 %585
      %587 = vrot.lane.b32.xlu0 %v530, 112
      %v588 = vpop.permute.xlu0 %587
      %589 = vrot.lane.b32.xlu0 %v532, 112
      %v590 = vpop.permute.xlu0 %589
      %vm591 = vcmp.lt.s32.totalorder %v407, 112
      %v592 = vsel %vm591, %v584, %v588
      %v593 = vsel %vm591, %v586, %v590
      %v594 = vsel %vm591, %v588, %v584
      %v595 = vsel %vm591, %v590, %v586
      %v596 = vsel %vm425, 1, 0
      %v597 = vsel %vm426, 1, 0
      %vm598 = vcmp.eq.s32.totalorder %v596, 1
      %vm599 = vcmp.eq.s32.totalorder %v597, 1
      %v600 = vsel %vm598, %v592, -1e+30
      %v601 = vsel %vm599, %v594, -1e+30
      %v602 = vsel %vm598, %v593, -1e+30
      %v603 = vsel %vm599, %v595, -1e+30
      %v604 = vmax.f32 %v579, %v600
      %v605 = vmax.f32 %v580, %v601
      %v606 = vmax.f32 %v581, %v602
      %v607 = vmax.f32 %v582, %v603
      %608 = vrot.lane.b32.xlu0 %v529, 96
      %v609 = vpop.permute.xlu0 %608
      %610 = vrot.lane.b32.xlu0 %v531, 96
      %v611 = vpop.permute.xlu0 %610
      %612 = vrot.lane.b32.xlu0 %v530, 96
      %v613 = vpop.permute.xlu0 %612
      %614 = vrot.lane.b32.xlu0 %v532, 96
      %v615 = vpop.permute.xlu0 %614
      %vm616 = vcmp.lt.s32.totalorder %v407, 96
      %v617 = vsel %vm616, %v609, %v613
      %v618 = vsel %vm616, %v611, %v615
      %v619 = vsel %vm616, %v613, %v609
      %v620 = vsel %vm616, %v615, %v611
      %v621 = vsel %vm427, 1, 0
      %v622 = vsel %vm428, 1, 0
      %vm623 = vcmp.eq.s32.totalorder %v621, 1
      %vm624 = vcmp.eq.s32.totalorder %v622, 1
      %v625 = vsel %vm623, %v617, -1e+30
      %v626 = vsel %vm624, %v619, -1e+30
      %v627 = vsel %vm623, %v618, -1e+30
      %v628 = vsel %vm624, %v620, -1e+30
      %v629 = vmax.f32 %v604, %v625
      %v630 = vmax.f32 %v605, %v626
      %v631 = vmax.f32 %v606, %v627
      %v632 = vmax.f32 %v607, %v628
      %v633 = vpack.c.bf16 %v631, %v629
      %v634 = vpack.c.bf16 %v632, %v630
      %635 = vst [vmem:[#allocation2 + $0x10] sm:$0xff] %v633
      %636 = vst [vmem:[#allocation2 + $0x18] sm:$0xff] %v634
      %637 = vrot.lane.b32.xlu0 %v629, 2
      %v638 = vpop.permute.xlu0 %637
      %639 = vrot.lane.b32.xlu0 %v631, 2
      %v640 = vpop.permute.xlu0 %639
      %641 = vrot.lane.b32.xlu0 %v630, 2
      %v642 = vpop.permute.xlu0 %641
      %643 = vrot.lane.b32.xlu0 %v632, 2
      %v644 = vpop.permute.xlu0 %643
      %v645 = vsel %vm441, %v638, %v642
      %v646 = vsel %vm441, %v640, %v644
      %v647 = vsel %vm441, %v642, %v638
      %v648 = vsel %vm441, %v644, %v640
      %v649 = vsel %vm448, %v647, -1e+30
      %v650 = vsel %vm449, %v645, -1e+30
      %v651 = vsel %vm448, %v648, -1e+30
      %v652 = vsel %vm449, %v646, -1e+30
      %v653 = vmax.f32 %v629, %v649
      %v654 = vmax.f32 %v630, %v650
      %v655 = vmax.f32 %v631, %v651
      %v656 = vmax.f32 %v632, %v652
      %657 = vrot.lane.b32.xlu0 %v629, 1
      %v658 = vpop.permute.xlu0 %657
      %659 = vrot.lane.b32.xlu0 %v631, 1
      %v660 = vpop.permute.xlu0 %659
      %661 = vrot.lane.b32.xlu0 %v630, 1
      %v662 = vpop.permute.xlu0 %661
      %663 = vrot.lane.b32.xlu0 %v632, 1
      %v664 = vpop.permute.xlu0 %663
      %v665 = vsel %vm466, %v658, %v662
      %v666 = vsel %vm466, %v660, %v664
      %v667 = vsel %vm466, %v662, %v658
      %v668 = vsel %vm466, %v664, %v660
      %v669 = vsel %vm473, %v667, -1e+30
      %v670 = vsel %vm474, %v665, -1e+30
      %v671 = vsel %vm473, %v668, -1e+30
      %v672 = vsel %vm474, %v666, -1e+30
      %v673 = vmax.f32 %v653, %v669
      %v674 = vmax.f32 %v654, %v670
      %v675 = vmax.f32 %v655, %v671
      %v676 = vmax.f32 %v656, %v672
      %677 = vrot.lane.b32.xlu0 %v629, 127
      %v678 = vpop.permute.xlu0 %677
      %679 = vrot.lane.b32.xlu0 %v631, 127
      %v680 = vpop.permute.xlu0 %679
      %681 = vrot.lane.b32.xlu0 %v630, 127
      %v682 = vpop.permute.xlu0 %681
      %683 = vrot.lane.b32.xlu0 %v632, 127
      %v684 = vpop.permute.xlu0 %683
      %v685 = vsel %vm491, %v678, %v682
      %v686 = vsel %vm491, %v680, %v684
      %v687 = vsel %vm491, %v682, %v678
      %v688 = vsel %vm491, %v684, %v680
      %v689 = vsel %vm498, %v685, -1e+30
      %v690 = vsel %vm499, %v687, -1e+30
      %v691 = vsel %vm498, %v686, -1e+30
      %v692 = vsel %vm499, %v688, -1e+30
      %v693 = vmax.f32 %v673, %v689
      %v694 = vmax.f32 %v674, %v690
      %v695 = vmax.f32 %v675, %v691
      %v696 = vmax.f32 %v676, %v692
      %697 = vrot.lane.b32.xlu0 %v629, 126
      %v698 = vpop.permute.xlu0 %697
      %699 = vrot.lane.b32.xlu0 %v631, 126
      %v700 = vpop.permute.xlu0 %699
      %701 = vrot.lane.b32.xlu0 %v630, 126
      %v702 = vpop.permute.xlu0 %701
      %703 = vrot.lane.b32.xlu0 %v632, 126
      %v704 = vpop.permute.xlu0 %703
      %v705 = vsel %vm516, %v698, %v702
      %v706 = vsel %vm516, %v700, %v704
      %v707 = vsel %vm516, %v702, %v698
      %v708 = vsel %vm516, %v704, %v700
      %v709 = vsel %vm523, %v705, -1e+30
      %v710 = vsel %vm524, %v707, -1e+30
      %v711 = vsel %vm523, %v706, -1e+30
      %v712 = vsel %vm524, %v708, -1e+30
      %v713 = vmax.f32 %v693, %v709
      %v714 = vmax.f32 %v694, %v710
      %v715 = vmax.f32 %v695, %v711
      %v716 = vmax.f32 %v696, %v712
      %717 = vrot.lane.b32.xlu0 %v713, 32
      %v718 = vpop.permute.xlu0 %717
      %719 = vrot.lane.b32.xlu0 %v715, 32
      %v720 = vpop.permute.xlu0 %719
      %721 = vrot.lane.b32.xlu0 %v714, 32
      %v722 = vpop.permute.xlu0 %721
      %723 = vrot.lane.b32.xlu0 %v716, 32
      %v724 = vpop.permute.xlu0 %723
      %v725 = vsel %vm541, %v718, %v722
      %v726 = vsel %vm541, %v720, %v724
      %v727 = vsel %vm541, %v722, %v718
      %v728 = vsel %vm541, %v724, %v720
      %v729 = vsel %vm548, %v727, -1e+30
      %v730 = vsel %vm549, %v725, -1e+30
      %v731 = vsel %vm548, %v728, -1e+30
      %v732 = vsel %vm549, %v726, -1e+30
      %v733 = vmax.f32 %v713, %v729
      %v734 = vmax.f32 %v714, %v730
      %v735 = vmax.f32 %v715, %v731
      %v736 = vmax.f32 %v716, %v732
      %737 = vrot.lane.b32.xlu0 %v713, 16
      %v738 = vpop.permute.xlu0 %737
      %739 = vrot.lane.b32.xlu0 %v715, 16
      %v740 = vpop.permute.xlu0 %739
      %741 = vrot.lane.b32.xlu0 %v714, 16
      %v742 = vpop.permute.xlu0 %741
      %743 = vrot.lane.b32.xlu0 %v716, 16
      %v744 = vpop.permute.xlu0 %743
      %v745 = vsel %vm566, %v738, %v742
      %v746 = vsel %vm566, %v740, %v744
      %v747 = vsel %vm566, %v742, %v738
      %v748 = vsel %vm566, %v744, %v740
      %v749 = vsel %vm573, %v747, -1e+30
      %v750 = vsel %vm574, %v745, -1e+30
      %v751 = vsel %vm573, %v748, -1e+30
      %v752 = vsel %vm574, %v746, -1e+30
      %v753 = vmax.f32 %v733, %v749
      %v754 = vmax.f32 %v734, %v750
      %v755 = vmax.f32 %v735, %v751
      %v756 = vmax.f32 %v736, %v752
      %757 = vrot.lane.b32.xlu0 %v713, 112
      %v758 = vpop.permute.xlu0 %757
      %759 = vrot.lane.b32.xlu0 %v715, 112
      %v760 = vpop.permute.xlu0 %759
      %761 = vrot.lane.b32.xlu0 %v714, 112
      %v762 = vpop.permute.xlu0 %761
      %763 = vrot.lane.b32.xlu0 %v716, 112
      %v764 = vpop.permute.xlu0 %763
      %v765 = vsel %vm591, %v758, %v762
      %v766 = vsel %vm591, %v760, %v764
      %v767 = vsel %vm591, %v762, %v758
      %v768 = vsel %vm591, %v764, %v760
      %v769 = vsel %vm598, %v765, -1e+30
      %v770 = vsel %vm599, %v767, -1e+30
      %v771 = vsel %vm598, %v766, -1e+30
      %v772 = vsel %vm599, %v768, -1e+30
      %v773 = vmax.f32 %v753, %v769
      %v774 = vmax.f32 %v754, %v770
      %v775 = vmax.f32 %v755, %v771
      %v776 = vmax.f32 %v756, %v772
      %777 = vrot.lane.b32.xlu0 %v713, 96
      %v778 = vpop.permute.xlu0 %777
      %779 = vrot.lane.b32.xlu0 %v715, 96
      %v780 = vpop.permute.xlu0 %779
      %781 = vrot.lane.b32.xlu0 %v714, 96
      %v782 = vpop.permute.xlu0 %781
      %783 = vrot.lane.b32.xlu0 %v716, 96
      %v784 = vpop.permute.xlu0 %783
      %v785 = vsel %vm616, %v778, %v782
      %v786 = vsel %vm616, %v780, %v784
      %v787 = vsel %vm616, %v782, %v778
      %v788 = vsel %vm616, %v784, %v780
      %v789 = vsel %vm623, %v785, -1e+30
      %v790 = vsel %vm624, %v787, -1e+30
      %v791 = vsel %vm623, %v786, -1e+30
      %v792 = vsel %vm624, %v788, -1e+30
      %v793 = vmax.f32 %v773, %v789
      %v794 = vmax.f32 %v774, %v790
      %v795 = vmax.f32 %v775, %v791
      %v796 = vmax.f32 %v776, %v792
      %v797 = vpack.c.bf16 %v795, %v793
      %v798 = vpack.c.bf16 %v796, %v794
      %799 = vst [vmem:[#allocation2 + $0x20] sm:$0xff] %v797
      %800 = vst [vmem:[#allocation2 + $0x28] sm:$0xff] %v798
      %801 = vrot.lane.b32.xlu0 %v793, 2
      %v802 = vpop.permute.xlu0 %801
      %803 = vrot.lane.b32.xlu0 %v795, 2
      %v804 = vpop.permute.xlu0 %803
      %805 = vrot.lane.b32.xlu0 %v794, 2
      %v806 = vpop.permute.xlu0 %805
      %807 = vrot.lane.b32.xlu0 %v796, 2
      %v808 = vpop.permute.xlu0 %807
      %v809 = vsel %vm441, %v802, %v806
      %v810 = vsel %vm441, %v804, %v808
      %v811 = vsel %vm441, %v806, %v802
      %v812 = vsel %vm441, %v808, %v804
      %v813 = vsel %vm448, %v811, -1e+30
      %v814 = vsel %vm449, %v809, -1e+30
      %v815 = vsel %vm448, %v812, -1e+30
      %v816 = vsel %vm449, %v810, -1e+30
      %v817 = vmax.f32 %v793, %v813
      %v818 = vmax.f32 %v794, %v814
      %v819 = vmax.f32 %v795, %v815
      %v820 = vmax.f32 %v796, %v816
      %821 = vrot.lane.b32.xlu0 %v793, 1
      %v822 = vpop.permute.xlu0 %821
      %823 = vrot.lane.b32.xlu0 %v795, 1
      %v824 = vpop.permute.xlu0 %823
      %825 = vrot.lane.b32.xlu0 %v794, 1
      %v826 = vpop.permute.xlu0 %825
      %827 = vrot.lane.b32.xlu0 %v796, 1
      %v828 = vpop.permute.xlu0 %827
      %v829 = vsel %vm466, %v822, %v826
      %v830 = vsel %vm466, %v824, %v828
      %v831 = vsel %vm466, %v826, %v822
      %v832 = vsel %vm466, %v828, %v824
      %v833 = vsel %vm473, %v831, -1e+30
      %v834 = vsel %vm474, %v829, -1e+30
      %v835 = vsel %vm473, %v832, -1e+30
      %v836 = vsel %vm474, %v830, -1e+30
      %v837 = vmax.f32 %v817, %v833
      %v838 = vmax.f32 %v818, %v834
      %v839 = vmax.f32 %v819, %v835
      %v840 = vmax.f32 %v820, %v836
      %841 = vrot.lane.b32.xlu0 %v793, 127
      %v842 = vpop.permute.xlu0 %841
      %843 = vrot.lane.b32.xlu0 %v795, 127
      %v844 = vpop.permute.xlu0 %843
      %845 = vrot.lane.b32.xlu0 %v794, 127
      %v846 = vpop.permute.xlu0 %845
      %847 = vrot.lane.b32.xlu0 %v796, 127
      %v848 = vpop.permute.xlu0 %847
      %v849 = vsel %vm491, %v842, %v846
      %v850 = vsel %vm491, %v844, %v848
      %v851 = vsel %vm491, %v846, %v842
      %v852 = vsel %vm491, %v848, %v844
      %v853 = vsel %vm498, %v849, -1e+30
      %v854 = vsel %vm499, %v851, -1e+30
      %v855 = vsel %vm498, %v850, -1e+30
      %v856 = vsel %vm499, %v852, -1e+30
      %v857 = vmax.f32 %v837, %v853
      %v858 = vmax.f32 %v838, %v854
      %v859 = vmax.f32 %v839, %v855
      %v860 = vmax.f32 %v840, %v856
      %861 = vrot.lane.b32.xlu0 %v793, 126
      %v862 = vpop.permute.xlu0 %861
      %863 = vrot.lane.b32.xlu0 %v795, 126
      %v864 = vpop.permute.xlu0 %863
      %865 = vrot.lane.b32.xlu0 %v794, 126
      %v866 = vpop.permute.xlu0 %865
      %867 = vrot.lane.b32.xlu0 %v796, 126
      %v868 = vpop.permute.xlu0 %867
      %v869 = vsel %vm516, %v862, %v866
      %v870 = vsel %vm516, %v864, %v868
      %v871 = vsel %vm516, %v866, %v862
      %v872 = vsel %vm516, %v868, %v864
      %v873 = vsel %vm523, %v869, -1e+30
      %v874 = vsel %vm524, %v871, -1e+30
      %v875 = vsel %vm523, %v870, -1e+30
      %v876 = vsel %vm524, %v872, -1e+30
      %v877 = vmax.f32 %v857, %v873
      %v878 = vmax.f32 %v858, %v874
      %v879 = vmax.f32 %v859, %v875
      %v880 = vmax.f32 %v860, %v876
      %881 = vrot.lane.b32.xlu0 %v877, 32
      %v882 = vpop.permute.xlu0 %881
      %883 = vrot.lane.b32.xlu0 %v879, 32
      %v884 = vpop.permute.xlu0 %883
      %885 = vrot.lane.b32.xlu0 %v878, 32
      %v886 = vpop.permute.xlu0 %885
      %887 = vrot.lane.b32.xlu0 %v880, 32
      %v888 = vpop.permute.xlu0 %887
      %v889 = vsel %vm541, %v882, %v886
      %v890 = vsel %vm541, %v884, %v888
      %v891 = vsel %vm541, %v886, %v882
      %v892 = vsel %vm541, %v888, %v884
      %v893 = vsel %vm548, %v891, -1e+30
      %v894 = vsel %vm549, %v889, -1e+30
      %v895 = vsel %vm548, %v892, -1e+30
      %v896 = vsel %vm549, %v890, -1e+30
      %v897 = vmax.f32 %v877, %v893
      %v898 = vmax.f32 %v878, %v894
      %v899 = vmax.f32 %v879, %v895
      %v900 = vmax.f32 %v880, %v896
      %901 = vrot.lane.b32.xlu0 %v877, 16
      %v902 = vpop.permute.xlu0 %901
      %903 = vrot.lane.b32.xlu0 %v879, 16
      %v904 = vpop.permute.xlu0 %903
      %905 = vrot.lane.b32.xlu0 %v878, 16
      %v906 = vpop.permute.xlu0 %905
      %907 = vrot.lane.b32.xlu0 %v880, 16
      %v908 = vpop.permute.xlu0 %907
      %v909 = vsel %vm566, %v902, %v906
      %v910 = vsel %vm566, %v904, %v908
      %v911 = vsel %vm566, %v906, %v902
      %v912 = vsel %vm566, %v908, %v904
      %v913 = vsel %vm573, %v911, -1e+30
      %v914 = vsel %vm574, %v909, -1e+30
      %v915 = vsel %vm573, %v912, -1e+30
      %v916 = vsel %vm574, %v910, -1e+30
      %v917 = vmax.f32 %v897, %v913
      %v918 = vmax.f32 %v898, %v914
      %v919 = vmax.f32 %v899, %v915
      %v920 = vmax.f32 %v900, %v916
      %921 = vrot.lane.b32.xlu0 %v877, 112
      %v922 = vpop.permute.xlu0 %921
      %923 = vrot.lane.b32.xlu0 %v879, 112
      %v924 = vpop.permute.xlu0 %923
      %925 = vrot.lane.b32.xlu0 %v878, 112
      %v926 = vpop.permute.xlu0 %925
      %927 = vrot.lane.b32.xlu0 %v880, 112
      %v928 = vpop.permute.xlu0 %927
      %v929 = vsel %vm591, %v922, %v926
      %v930 = vsel %vm591, %v924, %v928
      %v931 = vsel %vm591, %v926, %v922
      %v932 = vsel %vm591, %v928, %v924
      %v933 = vsel %vm598, %v929, -1e+30
      %v934 = vsel %vm599, %v931, -1e+30
      %v935 = vsel %vm598, %v930, -1e+30
      %v936 = vsel %vm599, %v932, -1e+30
      %v937 = vmax.f32 %v917, %v933
      %v938 = vmax.f32 %v918, %v934
      %v939 = vmax.f32 %v919, %v935
      %v940 = vmax.f32 %v920, %v936
      %941 = vrot.lane.b32.xlu0 %v877, 96
      %v942 = vpop.permute.xlu0 %941
      %943 = vrot.lane.b32.xlu0 %v879, 96
      %v944 = vpop.permute.xlu0 %943
      %945 = vrot.lane.b32.xlu0 %v878, 96
      %v946 = vpop.permute.xlu0 %945
      %947 = vrot.lane.b32.xlu0 %v880, 96
      %v948 = vpop.permute.xlu0 %947
      %v949 = vsel %vm616, %v942, %v946
      %v950 = vsel %vm616, %v944, %v948
      %v951 = vsel %vm616, %v946, %v942
      %v952 = vsel %vm616, %v948, %v944
      %v953 = vsel %vm623, %v949, -1e+30
      %v954 = vsel %vm624, %v951, -1e+30
      %v955 = vsel %vm623, %v950, -1e+30
      %v956 = vsel %vm624, %v952, -1e+30
      %v957 = vmax.f32 %v937, %v953
      %v958 = vmax.f32 %v938, %v954
      %v959 = vmax.f32 %v939, %v955
      %v960 = vmax.f32 %v940, %v956
      %v961 = vpack.c.bf16 %v959, %v957
      %v962 = vpack.c.bf16 %v960, %v958
      %963 = vst [vmem:[#allocation2 + $0x30] sm:$0xff] %v961
      %964 = vst [vmem:[#allocation2 + $0x38] sm:$0xff] %v962
      %v965 = vld [vmem:[%s4] sm:$0xf]
      %v966 = vld [vmem:[%s4 + $0x4] sm:$0xf]
      %v967 = vld [vmem:[#allocation2] sm:$0xff]
      %v968 = vld [vmem:[#allocation2 + $0x8] sm:$0xff]
      %v969 = vld [vmem:[#allocation2 + $0x10] sm:$0xff]
      %v970 = vld [vmem:[#allocation2 + $0x18] sm:$0xff]
      %v971 = vld [vmem:[#allocation2 + $0x20] sm:$0xff]
      %v972 = vld [vmem:[#allocation2 + $0x28] sm:$0xff]
      %v973 = vld [vmem:[#allocation2 + $0x30] sm:$0xff]
      %v974 = vld [vmem:[#allocation2 + $0x38] sm:$0xff]
      %v977 = vunpack.c.l.b16 %v965
      %v978 = vunpack.c.l.b16 %v966
      %v979 = vpack.c.b16 %v978, %v977
      %vm980 = vcmask 523264
      %v982 = vsel %vm980, %v979, 0
      %984 = vmatprep.subr.bf16.mxu0 %v968
      %985 = vmatpush1.bf16.msra.mxu0 %v967
      %986 = vmatprep.subr.bf16.mxu0 %v970
      %987 = vmatpush1.bf16.msra.mxu0 %v969
      %988 = vmatprep.subr.bf16.mxu0 %v972
      %989 = vmatpush1.bf16.msra.mxu0 %v971
      %990 = vmatprep.subr.bf16.mxu0 %v974
      %991 = vmatpush1.bf16.msra.mxu0 %v973
      %992 = vmatprep.subr.bf16.mxu0 0
      %993 = vmatpush1.bf16.msra.mxu0 0
      %994 = vmatprep.subr.bf16.mxu0 0
      %995 = vmatpush1.bf16.msra.mxu0 0
      %996 = vmatprep.subr.bf16.mxu0 0
      %997 = vmatpush1.bf16.msra.mxu0 0
      %998 = vmatprep.subr.bf16.mxu0 0
      %999 = vmatpush1.bf16.msra.mxu0 0
      %1000 = vmatprep.subr.bf16.mxu0 0
      %1001 = vmatpush1.bf16.msra.mxu0 0
      %1002 = vmatprep.subr.bf16.mxu0 0
      %1003 = vmatpush1.bf16.msra.mxu0 0
      %1004 = vmatprep.subr.bf16.mxu0 0
      %1005 = vmatpush1.bf16.msra.mxu0 0
      %1006 = vmatprep.subr.bf16.mxu0 0
      %1007 = vmatpush1.bf16.msra.mxu0 0
      %1008 = vmatprep.subr.bf16.mxu0 0
      %1009 = vmatpush1.bf16.msra.mxu0 0
      %1010 = vmatprep.subr.bf16.mxu0 0
      %1011 = vmatpush1.bf16.msra.mxu0 0
      %1012 = vmatprep.subr.bf16.mxu0 0
      %1013 = vmatpush1.bf16.msra.mxu0 0
      %1014 = vmatprep.subr.bf16.mxu0 0
      %1015 = vmatpush1.bf16.msra.mxu0 0
      %1016 = vmatprep.mubr.bf16.mxu0 0
      %1017 = vmatmul.mubr.bf16.gmra.mrb[0].mxu0 %v982
      %v1018 = vpop.f32.mrb[0].mxu0
      %v1019 = vadd.f32 0.0, %v1018
      %v1020 = vpop.f32.mrb[0].mxu0
      %v1021 = vadd.f32 0.0, %v1020
      %v1022 = vpop.f32.mrb[0].mxu0
      %v1023 = vadd.f32 0.0, %v1022
      %v1024 = vpop.f32.mrb[0].mxu0
      %v1025 = vadd.f32 0.0, %v1024
      %1026 = vdwg.mxu0
      %v1027 = vld [vmem:[%s5] sm:$0xff]
      %v1028 = vld [vmem:[%s5 + $0x8] sm:$0xff]
      %1030 = vset.pattern.permute.xlu0 0
      %1031 = vperm.xlu0 %1030, %v1027
      %v1032 = vpop.permute.xlu0 %1031
      %1035 = vset.pattern.permute.xlu0 0
      %1036 = vperm.xlu0 %1035, %v1028
      %v1037 = vpop.permute.xlu0 %1036
      %v1039 = vmul.f32 %v1019, %v1032
      %v1040 = vmul.f32 %v1021, %v1032
      %v1041 = vmul.f32 %v1023, %v1037
      %v1042 = vmul.f32 %v1025, %v1037
      %v1043 = vld [vmem:[%s6] sm:$0xff]
      %v1044 = vld [vmem:[%s6 + $0x8] sm:$0xff]
      %1046 = vset.pattern.permute.xlu0 0
      %1047 = vperm.xlu0 %1046, %v1043
      %v1048 = vpop.permute.xlu0 %1047
      %1051 = vset.pattern.permute.xlu0 0
      %1052 = vperm.xlu0 %1051, %v1044
      %v1053 = vpop.permute.xlu0 %1052
      %v1055 = vadd.f32 %v1039, %v1048
      %v1056 = vadd.f32 %v1040, %v1048
      %v1057 = vadd.f32 %v1041, %v1053
      %v1058 = vadd.f32 %v1042, %v1053
      %v1059 = vxor.u32 %v1055, 2147483648
      %v1060 = vxor.u32 %v1056, 2147483648
      %v1061 = vxor.u32 %v1057, 2147483648
      %v1062 = vxor.u32 %v1058, 2147483648
      %v1063 = vmul.f32 %v1059, 1.442695
      %v1064 = vpow.pop %v1063
      %v1065 = vmul.f32 %v1060, 1.442695
      %v1066 = vpow.pop %v1065
      %v1067 = vmul.f32 %v1061, 1.442695
      %v1068 = vpow.pop %v1067
      %v1069 = vmul.f32 %v1062, 1.442695
      %v1070 = vpow.pop %v1069
      %v1071 = vadd.f32 %v1064, 1.0
      %v1072 = vadd.f32 %v1066, 1.0
      %v1073 = vadd.f32 %v1068, 1.0
      %v1074 = vadd.f32 %v1070, 1.0
      %v1075 = vrcp.pop %v1071
      %v1076 = vmul.f32 1.0, %v1075
      %v1077 = vrcp.pop %v1072
      %v1078 = vmul.f32 1.0, %v1077
      %v1079 = vrcp.pop %v1073
      %v1080 = vmul.f32 1.0, %v1079
      %v1081 = vrcp.pop %v1074
      %v1082 = vmul.f32 1.0, %v1081
      %v1083 = vmul.f32 %v1055, %v1076
      %v1084 = vmul.f32 %v1056, %v1078
      %v1085 = vmul.f32 %v1057, %v1080
      %v1086 = vmul.f32 %v1058, %v1082
      %1087 = vst [vmem:[%s278] sm:$0xff] %v1083
      %1088 = vst [vmem:[%s278 + $0x8] sm:$0xff] %v1084
      %1089 = vst [vmem:[%s278 + $0x10] sm:$0xff] %v1085
      %1090 = vst [vmem:[%s278 + $0x18] sm:$0xff] %v1086
      %p1091 = scmp.lt.s32.totalorder %s18, 1
      %s1092 = scalar_select %p1091, %s18, 1
      %s1093 = smul.addr %s1092, 4
      %s1094 = smul.addr %s1093, 8
      %s1095 = scalar_lea.vmem %s7, %s1094
      // Predicated region
      $region49: #{spp_forward.1} parent=47 // pred_check
        %p1096 = pneg %p188
      $region50: #{spp_forward.1} parent=47 // pred_check_branch
        %1098 = sbr.rel (%p1096) target = $region52
      $region51: #{spp_forward.1} parent=47 // pred_region
        _
      $region52: #{spp_forward.1} parent=47 // pred_fallthru
        _
    $region48: #{spp_forward.1} parent=5 // pred_fallthru
      _
    %p1099 = scmp.le.s32.totalorder 2, %s13
    // Predicated region
    $region53: #{spp_forward.1} parent=5 // pred_check
      %p1100 = pneg %p1099
    $region54: #{spp_forward.1} parent=5 // pred_check_branch
      %1102 = sbr.rel (%p1100) target = $region56
    $region55: #{spp_forward.1} parent=5 // pred_region
      %s1103 = ssub.s32 %s13, 2
      // Predicated region
      $region57: #{spp_forward.1} parent=55 // pred_check
        %p1104 = pneg %p194
      $region58: #{spp_forward.1} parent=55 // pred_check_branch
        %1106 = sbr.rel (%p1104) target = $region60
      $region59: #{spp_forward.1} parent=55 // pred_region
        %p1107 = scmp.lt.s32.totalorder %s19, 1
        %s1108 = scalar_select %p1107, %s19, 1
        %s1109 = smul.addr %s1108, 4
        %s1110 = smul.addr %s1109, 8
        %s1111 = scalar_lea.vmem %s7, %s1110
      $region60: #{spp_forward.1} parent=55 // pred_fallthru
        _
    $region56: #{spp_forward.1} parent=5 // pred_fallthru
      _
  $region6: #{spp_forward.1} parent=0 // loop_footer
    %s17 = sadd.s32 1, %s13
  $region7: #{spp_forward.1} parent=0 // loop_footer_branch
    %12 = sbr.rel target = $region3
  $region8: #{spp_forward.1} parent=0 // loop_exit
    _

</llo_original>
